<compile_context>
chip_gen: v7x
topology: tpu7x:2x2x1
jax: 0.10.0
libtpu: 0.0.40
codegen_flags: <defaults>
</compile_context>

<pallas_src>
import functools
import math

import jax
import jax.numpy as jnp
from jax import lax
from jax.experimental import pallas as pl
from jax.experimental.pallas import tpu as pltpu

# ---------------- synthetic small-BERT config ----------------
B = 2          # batch
S = 8          # sequence length
H = 32         # hidden size
NH = 2         # attention heads
HD = H // NH   # head dim
FF = 64        # intermediate (FFN) size
NLAYERS = 2    # encoder layers
VOCAB = 100
TYPE_VOCAB = 2
MAX_POS = 16
LN_EPS = 1e-12


# ---------------- fused forward kernel ----------------
def _layernorm(x, g, b):
    mu = jnp.mean(x, axis=-1, keepdims=True)
    var = jnp.mean((x - mu) * (x - mu), axis=-1, keepdims=True)
    return (x - mu) * lax.rsqrt(var + LN_EPS) * g + b


def _gelu_tanh(x):
    # TODO(synk): BERT uses exact erf-GELU; tanh approximation used here (erf not relied on in Mosaic).
    c = math.sqrt(2.0 / math.pi)
    return 0.5 * x * (1.0 + jnp.tanh(c * (x + 0.044715 * x * x * x)))


def _simcse_fwd_kernel(emb_ref, mask_ref,
                       emb_g_ref, emb_b_ref,
                       qkv_w_ref, qkv_b_ref,
                       ao_w_ref, ao_b_ref,
                       aln_g_ref, aln_b_ref,
                       i_w_ref, i_b_ref,
                       o_w_ref, o_b_ref,
                       oln_g_ref, oln_b_ref,
                       pool_w_ref, pool_b_ref,
                       o_ref, *, pooling):
    # Per-batch tile (grid axis = batch): everything below is [S, *] 2D math in VMEM.
    x = emb_ref[0]                                   # [S, H]  summed embeddings (pre-LN)
    mask = mask_ref[0]                               # [1, S]  additive attention-mask bias

    h = _layernorm(x, emb_g_ref[...], emb_b_ref[...])

    scale = 1.0 / math.sqrt(HD)
    hidden_1 = h                                     # will hold output of layer 0

    for l in range(NLAYERS):                         # statically unrolled (NLAYERS small)
        # ---- fused QKV projection: one MXU pass over [H, 3H] ----
        qkv = jnp.dot(h, qkv_w_ref[l], preferred_element_type=jnp.float32) + qkv_b_ref[l]

        # ---- per-head attention; head-merge folded into the output projection ----
        w_ao = ao_w_ref[l]                           # [H, H]
        attn_out = ao_b_ref[l]                       # [1, H] (broadcasts to [S, H])
        for hd in range(NH):
            q = qkv[:, hd * HD:(hd + 1) * HD]                  # [S, HD]
            k = qkv[:, H + hd * HD:H + (hd + 1) * HD]          # [S, HD]
            v = qkv[:, 2 * H + hd * HD:2 * H + (hd + 1) * HD]  # [S, HD]
            # scores = q @ k^T  (contraction on head dim, no explicit transpose)
            s = lax.dot_general(q, k, (((1,), (1,)), ((), ())),
                                preferred_element_type=jnp.float32) * scale
            s = s + mask                                       # [S, S] + [1, S]
            s = s - jnp.max(s, axis=-1, keepdims=True)
            p = jnp.exp(s)
            p = p * pl.reciprocal(jnp.sum(p, axis=-1, keepdims=True), approx=True)
            ctx_h = jnp.dot(p, v, preferred_element_type=jnp.float32)          # [S, HD]
            # partial output projection for this head (avoids lane-concat of heads)
            attn_out = attn_out + jnp.dot(ctx_h, w_ao[hd * HD:(hd + 1) * HD, :],
                                          preferred_element_type=jnp.float32)

        # ---- residual + LayerNorm ----
        h1 = _layernorm(attn_out + h, aln_g_ref[l], aln_b_ref[l])

        # ---- FFN ----
        inter = jnp.dot(h1, i_w_ref[l], preferred_element_type=jnp.float32) + i_b_ref[l]
        inter = _gelu_tanh(inter)
        ffn = jnp.dot(inter, o_w_ref[l], preferred_element_type=jnp.float32) + o_b_ref[l]
        h = _layernorm(ffn + h1, oln_g_ref[l], oln_b_ref[l])

        if l == 0:
            hidden_1 = h

    # ---- pooling (statically specialized) ----
    if pooling == "cls":
        out = h[0:1, :]
    elif pooling == "pooler":
        cls = h[0:1, :]
        out = jnp.tanh(jnp.dot(cls, pool_w_ref[...], preferred_element_type=jnp.float32)
                       + pool_b_ref[...])
    elif pooling == "last-avg":
        out = jnp.mean(h, axis=0, keepdims=True)
    elif pooling == "first-last-avg":
        out = 0.5 * (jnp.mean(hidden_1, axis=0, keepdims=True)
                     + jnp.mean(h, axis=0, keepdims=True))
    else:
        raise ValueError(pooling)

    o_ref[0] = out.astype(o_ref.dtype)               # [1, H]


# ---------------- BlockSpec helpers ----------------
def _full_spec(shape):
    zeros = (0,) * len(shape)
    return pl.BlockSpec(tuple(shape), lambda b, _z=zeros: _z)


def _batch_spec(shape):
    rest = (0,) * (len(shape) - 1)
    return pl.BlockSpec((1,) + tuple(shape[1:]), lambda b, _r=rest: (b,) + _r)


# ---------------- parameter init (deterministic, synthetic) ----------------
def init_params(key):
    def nrm(k, shape):
        return 0.02 * jax.random.normal(k, shape, jnp.float32)

    keys = iter(jax.random.split(key, 64))
    p = {
        "word_emb": nrm(next(keys), (VOCAB, H)),
        "pos_emb": nrm(next(keys), (MAX_POS, H)),
        "type_emb": nrm(next(keys), (TYPE_VOCAB, H)),
        "emb_ln_g": jnp.ones((1, H), jnp.float32),
        "emb_ln_b": jnp.zeros((1, H), jnp.float32),
        "pooler_w": nrm(next(keys), (H, H)),
        "pooler_b": jnp.zeros((1, H), jnp.float32),
    }
    qkv_w, ao_w, i_w, o_w = [], [], [], []
    for _ in range(NLAYERS):
        q_w = nrm(next(keys), (H, H))
        k_w = nrm(next(keys), (H, H))
        v_w = nrm(next(keys), (H, H))
        qkv_w.append(jnp.concatenate([q_w, k_w, v_w], axis=1))   # [H, 3H]
        ao_w.append(nrm(next(keys), (H, H)))
        i_w.append(nrm(next(keys), (H, FF)))
        o_w.append(nrm(next(keys), (FF, H)))
    # stacked per-layer weights (leading NLAYERS axis)
    p["qkv_w"] = jnp.stack(qkv_w)                                # [L, H, 3H]
    p["qkv_b"] = jnp.zeros((NLAYERS, 1, 3 * H), jnp.float32)
    p["ao_w"] = jnp.stack(ao_w)                                  # [L, H, H]
    p["ao_b"] = jnp.zeros((NLAYERS, 1, H), jnp.float32)
    p["aln_g"] = jnp.ones((NLAYERS, 1, H), jnp.float32)
    p["aln_b"] = jnp.zeros((NLAYERS, 1, H), jnp.float32)
    p["i_w"] = jnp.stack(i_w)                                    # [L, H, FF]
    p["i_b"] = jnp.zeros((NLAYERS, 1, FF), jnp.float32)
    p["o_w"] = jnp.stack(o_w)                                    # [L, FF, H]
    p["o_b"] = jnp.zeros((NLAYERS, 1, H), jnp.float32)
    p["oln_g"] = jnp.ones((NLAYERS, 1, H), jnp.float32)
    p["oln_b"] = jnp.zeros((NLAYERS, 1, H), jnp.float32)
    return p


# ---------------- forward wrapper ----------------
@functools.partial(jax.jit, static_argnames=("pooling",))
def simcse_forward(params, input_ids, attention_mask, token_type_ids, pooling):
    # embedding gather stays in plain JAX (data-dependent gather = glue)
    we = params["word_emb"][input_ids]                      # [B, S, H]
    pe = params["pos_emb"][:S][None, :, :]                  # [1, S, H]
    te = params["type_emb"][token_type_ids]                 # [B, S, H]
    emb_sum = we + pe + te                                  # [B, S, H]

    # additive attention-mask bias per batch: [B, 1, S]
    mask_bias = ((1.0 - attention_mask.astype(jnp.float32)) * -10000.0)[:, None, :]

    weight_args = (
        params["emb_ln_g"], params["emb_ln_b"],
        params["qkv_w"], params["qkv_b"],
        params["ao_w"], params["ao_b"],
        params["aln_g"], params["aln_b"],
        params["i_w"], params["i_b"],
        params["o_w"], params["o_b"],
        params["oln_g"], params["oln_b"],
        params["pooler_w"], params["pooler_b"],
    )
    in_specs = [_batch_spec(emb_sum.shape), _batch_spec(mask_bias.shape)]
    in_specs += [_full_spec(w.shape) for w in weight_args]

    out = pl.pallas_call(
        functools.partial(_simcse_fwd_kernel, pooling=pooling),
        grid=(B,),
        in_specs=in_specs,
        out_specs=pl.BlockSpec((1, 1, H), lambda b: (b, 0, 0)),
        out_shape=jax.ShapeDtypeStruct((B, 1, H), jnp.float32),
        compiler_params=pltpu.CompilerParams(
            dimension_semantics=("parallel",),      # v7x: shard batch over both TCs
        ),
    )(emb_sum, mask_bias, *weight_args)
    return out[:, 0, :]                                     # [B, H]


# ---------------- main ----------------
if __name__ == "__main__":
    key = jax.random.PRNGKey(0)
    k_param, k_ids = jax.random.split(key)
    params = init_params(k_param)

    input_ids = jax.random.randint(k_ids, (B, S), 0, VOCAB, dtype=jnp.int32)
    attention_mask = jnp.array([[1, 1, 1, 1, 1, 1, 1, 1],
                                [1, 1, 1, 1, 1, 1, 0, 0]], dtype=jnp.int32)
    token_type_ids = jnp.zeros((B, S), dtype=jnp.int32)

    outs = {}
    for pooling in ("cls", "pooler", "last-avg", "first-last-avg"):
        out = simcse_forward(params, input_ids, attention_mask, token_type_ids, pooling)
        out = jax.block_until_ready(out)
        assert out.shape == (B, H), (pooling, out.shape)
        assert bool(jnp.all(jnp.isfinite(out)))
        outs[pooling] = out

    print("KERNEL_OK")
</pallas_src>

<mosaic_0001>
module attributes {stable_mosaic.version = 11 : i64} {
  func.func @_simcse_fwd_kernel(%arg0: i32, %arg1: memref<1x8x32xf32, #tpu.memory_space<vmem>>, %arg2: memref<1x1x8xf32, #tpu.memory_space<vmem>>, %arg3: memref<1x32xf32, #tpu.memory_space<vmem>>, %arg4: memref<1x32xf32, #tpu.memory_space<vmem>>, %arg5: memref<2x32x96xf32, #tpu.memory_space<vmem>>, %arg6: memref<2x1x96xf32, #tpu.memory_space<vmem>>, %arg7: memref<2x32x32xf32, #tpu.memory_space<vmem>>, %arg8: memref<2x1x32xf32, #tpu.memory_space<vmem>>, %arg9: memref<2x1x32xf32, #tpu.memory_space<vmem>>, %arg10: memref<2x1x32xf32, #tpu.memory_space<vmem>>, %arg11: memref<2x32x64xf32, #tpu.memory_space<vmem>>, %arg12: memref<2x1x64xf32, #tpu.memory_space<vmem>>, %arg13: memref<2x64x32xf32, #tpu.memory_space<vmem>>, %arg14: memref<2x1x32xf32, #tpu.memory_space<vmem>>, %arg15: memref<2x1x32xf32, #tpu.memory_space<vmem>>, %arg16: memref<2x1x32xf32, #tpu.memory_space<vmem>>, %arg17: memref<32x32xf32, #tpu.memory_space<vmem>>, %arg18: memref<1x32xf32, #tpu.memory_space<vmem>>, %arg19: memref<1x1x32xf32, #tpu.memory_space<vmem>>) attributes {dimension_semantics = [#tpu.dimension_semantics<parallel>], iteration_bounds = array<i64: 2>, scalar_prefetch = 0 : i64, scratch_operands = 0 : i64, tpu.core_type = #tpu.core_type<tc>, window_params = [{transform_indices = @transform_0, window_bounds = array<i64: 1, 8, 32>}, {transform_indices = @transform_1, window_bounds = array<i64: 1, 1, 8>}, {pipeline_mode = #tpu.pipeline_mode<synchronous>, transform_indices = @transform_2, window_bounds = array<i64: 1, 32>}, {pipeline_mode = #tpu.pipeline_mode<synchronous>, transform_indices = @transform_3, window_bounds = array<i64: 1, 32>}, {pipeline_mode = #tpu.pipeline_mode<synchronous>, transform_indices = @transform_4, window_bounds = array<i64: 2, 32, 96>}, {pipeline_mode = #tpu.pipeline_mode<synchronous>, transform_indices = @transform_5, window_bounds = array<i64: 2, 1, 96>}, {pipeline_mode = #tpu.pipeline_mode<synchronous>, transform_indices = @transform_6, window_bounds = array<i64: 2, 32, 32>}, {pipeline_mode = #tpu.pipeline_mode<synchronous>, transform_indices = @transform_7, window_bounds = array<i64: 2, 1, 32>}, {pipeline_mode = #tpu.pipeline_mode<synchronous>, transform_indices = @transform_8, window_bounds = array<i64: 2, 1, 32>}, {pipeline_mode = #tpu.pipeline_mode<synchronous>, transform_indices = @transform_9, window_bounds = array<i64: 2, 1, 32>}, {pipeline_mode = #tpu.pipeline_mode<synchronous>, transform_indices = @transform_10, window_bounds = array<i64: 2, 32, 64>}, {pipeline_mode = #tpu.pipeline_mode<synchronous>, transform_indices = @transform_11, window_bounds = array<i64: 2, 1, 64>}, {pipeline_mode = #tpu.pipeline_mode<synchronous>, transform_indices = @transform_12, window_bounds = array<i64: 2, 64, 32>}, {pipeline_mode = #tpu.pipeline_mode<synchronous>, transform_indices = @transform_13, window_bounds = array<i64: 2, 1, 32>}, {pipeline_mode = #tpu.pipeline_mode<synchronous>, transform_indices = @transform_14, window_bounds = array<i64: 2, 1, 32>}, {pipeline_mode = #tpu.pipeline_mode<synchronous>, transform_indices = @transform_15, window_bounds = array<i64: 2, 1, 32>}, {pipeline_mode = #tpu.pipeline_mode<synchronous>, transform_indices = @transform_16, window_bounds = array<i64: 32, 32>}, {pipeline_mode = #tpu.pipeline_mode<synchronous>, transform_indices = @transform_17, window_bounds = array<i64: 1, 32>}, {transform_indices = @transform_18, window_bounds = array<i64: 1, 1, 32>}]} {
    %c0 = arith.constant 0 : index
    %c0_0 = arith.constant 0 : index
    %c0_1 = arith.constant 0 : index
    %0 = vector.load %arg1[%c0, %c0_0, %c0_1] : memref<1x8x32xf32, #tpu.memory_space<vmem>>, vector<1x8x32xf32>
    %1 = vector.shape_cast %0 : vector<1x8x32xf32> to vector<8x32xf32>
    %c0_2 = arith.constant 0 : index
    %c0_3 = arith.constant 0 : index
    %c0_4 = arith.constant 0 : index
    %2 = vector.load %arg2[%c0_2, %c0_3, %c0_4] : memref<1x1x8xf32, #tpu.memory_space<vmem>>, vector<1x1x8xf32>
    %3 = vector.shape_cast %2 : vector<1x1x8xf32> to vector<1x8xf32>
    %c0_5 = arith.constant 0 : index
    %c0_6 = arith.constant 0 : index
    %4 = vector.load %arg3[%c0_5, %c0_6] : memref<1x32xf32, #tpu.memory_space<vmem>>, vector<1x32xf32>
    %c0_7 = arith.constant 0 : index
    %c0_8 = arith.constant 0 : index
    %5 = vector.load %arg4[%c0_7, %c0_8] : memref<1x32xf32, #tpu.memory_space<vmem>>, vector<1x32xf32>
    %cst = arith.constant dense<0.000000e+00> : vector<8xf32>
    %6 = vector.multi_reduction <add>, %1, %cst [1] : vector<8x32xf32> to vector<8xf32>
    %7 = vector.shape_cast %6 : vector<8xf32> to vector<8x1xf32>
    %cst_9 = arith.constant 3.200000e+01 : f32
    %8 = vector.broadcast %cst_9 : f32 to vector<8x1xf32>
    %9 = arith.divf %7, %8 : vector<8x1xf32>
    %10 = vector.broadcast %9 : vector<8x1xf32> to vector<8x32xf32>
    %11 = arith.subf %1, %10 : vector<8x32xf32>
    %12 = vector.broadcast %9 : vector<8x1xf32> to vector<8x32xf32>
    %13 = arith.subf %1, %12 : vector<8x32xf32>
    %14 = arith.mulf %11, %13 : vector<8x32xf32>
    %cst_10 = arith.constant dense<0.000000e+00> : vector<8xf32>
    %15 = vector.multi_reduction <add>, %14, %cst_10 [1] : vector<8x32xf32> to vector<8xf32>
    %16 = vector.shape_cast %15 : vector<8xf32> to vector<8x1xf32>
    %cst_11 = arith.constant 3.200000e+01 : f32
    %17 = vector.broadcast %cst_11 : f32 to vector<8x1xf32>
    %18 = arith.divf %16, %17 : vector<8x1xf32>
    %19 = vector.broadcast %9 : vector<8x1xf32> to vector<8x32xf32>
    %20 = arith.subf %1, %19 : vector<8x32xf32>
    %cst_12 = arith.constant 9.99999996E-13 : f32
    %21 = vector.broadcast %cst_12 : f32 to vector<8x1xf32>
    %22 = arith.addf %18, %21 : vector<8x1xf32>
    %23 = math.rsqrt %22 : vector<8x1xf32>
    %24 = vector.broadcast %23 : vector<8x1xf32> to vector<8x32xf32>
    %25 = arith.mulf %20, %24 : vector<8x32xf32>
    %26 = vector.broadcast %4 : vector<1x32xf32> to vector<8x32xf32>
    %27 = arith.mulf %25, %26 : vector<8x32xf32>
    %28 = vector.broadcast %5 : vector<1x32xf32> to vector<8x32xf32>
    %29 = arith.addf %27, %28 : vector<8x32xf32>
    %c0_13 = arith.constant 0 : index
    %c0_14 = arith.constant 0 : index
    %c0_15 = arith.constant 0 : index
    %30 = vector.load %arg5[%c0_13, %c0_14, %c0_15] : memref<2x32x96xf32, #tpu.memory_space<vmem>>, vector<1x32x96xf32>
    %31 = vector.shape_cast %30 : vector<1x32x96xf32> to vector<32x96xf32>
    %cst_16 = arith.constant dense<0.000000e+00> : vector<8x96xf32>
    %32 = tpu.matmul %29, %31, %cst_16 {dimension_numbers = #tpu.dot_dimension_numbers<[1], [0], [0], [1], [0, 0, 1, 1], [], []>} : vector<8x32xf32>, vector<32x96xf32>, vector<8x96xf32> -> vector<8x96xf32>
    %c0_17 = arith.constant 0 : index
    %c0_18 = arith.constant 0 : index
    %c0_19 = arith.constant 0 : index
    %33 = vector.load %arg6[%c0_17, %c0_18, %c0_19] : memref<2x1x96xf32, #tpu.memory_space<vmem>>, vector<1x1x96xf32>
    %34 = vector.shape_cast %33 : vector<1x1x96xf32> to vector<1x96xf32>
    %35 = vector.broadcast %34 : vector<1x96xf32> to vector<8x96xf32>
    %36 = arith.addf %32, %35 : vector<8x96xf32>
    %c0_20 = arith.constant 0 : index
    %c0_21 = arith.constant 0 : index
    %c0_22 = arith.constant 0 : index
    %37 = vector.load %arg7[%c0_20, %c0_21, %c0_22] : memref<2x32x32xf32, #tpu.memory_space<vmem>>, vector<1x32x32xf32>
    %38 = vector.shape_cast %37 : vector<1x32x32xf32> to vector<32x32xf32>
    %c0_23 = arith.constant 0 : index
    %c0_24 = arith.constant 0 : index
    %c0_25 = arith.constant 0 : index
    %39 = vector.load %arg8[%c0_23, %c0_24, %c0_25] : memref<2x1x32xf32, #tpu.memory_space<vmem>>, vector<1x1x32xf32>
    %40 = vector.shape_cast %39 : vector<1x1x32xf32> to vector<1x32xf32>
    %41 = vector.extract_strided_slice %36 {offsets = [0, 0], sizes = [8, 16], strides = [1, 1]} : vector<8x96xf32> to vector<8x16xf32>
    %42 = vector.extract_strided_slice %36 {offsets = [0, 32], sizes = [8, 16], strides = [1, 1]} : vector<8x96xf32> to vector<8x16xf32>
    %43 = vector.extract_strided_slice %36 {offsets = [0, 64], sizes = [8, 16], strides = [1, 1]} : vector<8x96xf32> to vector<8x16xf32>
    %cst_26 = arith.constant dense<0.000000e+00> : vector<8x8xf32>
    %44 = tpu.matmul %41, %42, %cst_26 {dimension_numbers = #tpu.dot_dimension_numbers<[1], [1], [0], [0], [0, 0, 1, 0], [], []>} : vector<8x16xf32>, vector<8x16xf32>, vector<8x8xf32> -> vector<8x8xf32>
    %cst_27 = arith.constant 2.500000e-01 : f32
    %45 = vector.broadcast %cst_27 : f32 to vector<8x8xf32>
    %46 = arith.mulf %44, %45 : vector<8x8xf32>
    %47 = vector.broadcast %3 : vector<1x8xf32> to vector<8x8xf32>
    %48 = arith.addf %46, %47 : vector<8x8xf32>
    %cst_28 = arith.constant dense<0xFF800000> : vector<8xf32>
    %49 = vector.multi_reduction <maximumf>, %48, %cst_28 [1] : vector<8x8xf32> to vector<8xf32>
    %50 = vector.shape_cast %49 : vector<8xf32> to vector<8x1xf32>
    %51 = vector.broadcast %50 : vector<8x1xf32> to vector<8x8xf32>
    %52 = arith.subf %48, %51 : vector<8x8xf32>
    %53 = math.exp %52 : vector<8x8xf32>
    %cst_29 = arith.constant dense<0.000000e+00> : vector<8xf32>
    %54 = vector.multi_reduction <add>, %53, %cst_29 [1] : vector<8x8xf32> to vector<8xf32>
    %55 = vector.shape_cast %54 : vector<8xf32> to vector<8x1xf32>
    %56 = tpu.reciprocal %55 {approx = true} : vector<8x1xf32> -> vector<8x1xf32>
    %57 = vector.broadcast %56 : vector<8x1xf32> to vector<8x8xf32>
    %58 = arith.mulf %53, %57 : vector<8x8xf32>
    %cst_30 = arith.constant dense<0.000000e+00> : vector<8x16xf32>
    %59 = tpu.matmul %58, %43, %cst_30 {dimension_numbers = #tpu.dot_dimension_numbers<[1], [0], [0], [1], [0, 0, 1, 1], [], []>} : vector<8x8xf32>, vector<8x16xf32>, vector<8x16xf32> -> vector<8x16xf32>
    %60 = vector.extract_strided_slice %38 {offsets = [0, 0], sizes = [16, 32], strides = [1, 1]} : vector<32x32xf32> to vector<16x32xf32>
    %cst_31 = arith.constant dense<0.000000e+00> : vector<8x32xf32>
    %61 = tpu.matmul %59, %60, %cst_31 {dimension_numbers = #tpu.dot_dimension_numbers<[1], [0], [0], [1], [0, 0, 1, 1], [], []>} : vector<8x16xf32>, vector<16x32xf32>, vector<8x32xf32> -> vector<8x32xf32>
    %62 = vector.broadcast %40 : vector<1x32xf32> to vector<8x32xf32>
    %63 = arith.addf %62, %61 : vector<8x32xf32>
    %64 = vector.extract_strided_slice %36 {offsets = [0, 16], sizes = [8, 16], strides = [1, 1]} : vector<8x96xf32> to vector<8x16xf32>
    %65 = vector.extract_strided_slice %36 {offsets = [0, 48], sizes = [8, 16], strides = [1, 1]} : vector<8x96xf32> to vector<8x16xf32>
    %66 = vector.extract_strided_slice %36 {offsets = [0, 80], sizes = [8, 16], strides = [1, 1]} : vector<8x96xf32> to vector<8x16xf32>
    %cst_32 = arith.constant dense<0.000000e+00> : vector<8x8xf32>
    %67 = tpu.matmul %64, %65, %cst_32 {dimension_numbers = #tpu.dot_dimension_numbers<[1], [1], [0], [0], [0, 0, 1, 0], [], []>} : vector<8x16xf32>, vector<8x16xf32>, vector<8x8xf32> -> vector<8x8xf32>
    %cst_33 = arith.constant 2.500000e-01 : f32
    %68 = vector.broadcast %cst_33 : f32 to vector<8x8xf32>
    %69 = arith.mulf %67, %68 : vector<8x8xf32>
    %70 = vector.broadcast %3 : vector<1x8xf32> to vector<8x8xf32>
    %71 = arith.addf %69, %70 : vector<8x8xf32>
    %cst_34 = arith.constant dense<0xFF800000> : vector<8xf32>
    %72 = vector.multi_reduction <maximumf>, %71, %cst_34 [1] : vector<8x8xf32> to vector<8xf32>
    %73 = vector.shape_cast %72 : vector<8xf32> to vector<8x1xf32>
    %74 = vector.broadcast %73 : vector<8x1xf32> to vector<8x8xf32>
    %75 = arith.subf %71, %74 : vector<8x8xf32>
    %76 = math.exp %75 : vector<8x8xf32>
    %cst_35 = arith.constant dense<0.000000e+00> : vector<8xf32>
    %77 = vector.multi_reduction <add>, %76, %cst_35 [1] : vector<8x8xf32> to vector<8xf32>
    %78 = vector.shape_cast %77 : vector<8xf32> to vector<8x1xf32>
    %79 = tpu.reciprocal %78 {approx = true} : vector<8x1xf32> -> vector<8x1xf32>
    %80 = vector.broadcast %79 : vector<8x1xf32> to vector<8x8xf32>
    %81 = arith.mulf %76, %80 : vector<8x8xf32>
    %cst_36 = arith.constant dense<0.000000e+00> : vector<8x16xf32>
    %82 = tpu.matmul %81, %66, %cst_36 {dimension_numbers = #tpu.dot_dimension_numbers<[1], [0], [0], [1], [0, 0, 1, 1], [], []>} : vector<8x8xf32>, vector<8x16xf32>, vector<8x16xf32> -> vector<8x16xf32>
    %83 = vector.extract_strided_slice %38 {offsets = [16, 0], sizes = [16, 32], strides = [1, 1]} : vector<32x32xf32> to vector<16x32xf32>
    %cst_37 = arith.constant dense<0.000000e+00> : vector<8x32xf32>
    %84 = tpu.matmul %82, %83, %cst_37 {dimension_numbers = #tpu.dot_dimension_numbers<[1], [0], [0], [1], [0, 0, 1, 1], [], []>} : vector<8x16xf32>, vector<16x32xf32>, vector<8x32xf32> -> vector<8x32xf32>
    %85 = arith.addf %63, %84 : vector<8x32xf32>
    %86 = arith.addf %85, %29 : vector<8x32xf32>
    %c0_38 = arith.constant 0 : index
    %c0_39 = arith.constant 0 : index
    %c0_40 = arith.constant 0 : index
    %87 = vector.load %arg9[%c0_38, %c0_39, %c0_40] : memref<2x1x32xf32, #tpu.memory_space<vmem>>, vector<1x1x32xf32>
    %88 = vector.shape_cast %87 : vector<1x1x32xf32> to vector<1x32xf32>
    %c0_41 = arith.constant 0 : index
    %c0_42 = arith.constant 0 : index
    %c0_43 = arith.constant 0 : index
    %89 = vector.load %arg10[%c0_41, %c0_42, %c0_43] : memref<2x1x32xf32, #tpu.memory_space<vmem>>, vector<1x1x32xf32>
    %90 = vector.shape_cast %89 : vector<1x1x32xf32> to vector<1x32xf32>
    %cst_44 = arith.constant dense<0.000000e+00> : vector<8xf32>
    %91 = vector.multi_reduction <add>, %86, %cst_44 [1] : vector<8x32xf32> to vector<8xf32>
    %92 = vector.shape_cast %91 : vector<8xf32> to vector<8x1xf32>
    %cst_45 = arith.constant 3.200000e+01 : f32
    %93 = vector.broadcast %cst_45 : f32 to vector<8x1xf32>
    %94 = arith.divf %92, %93 : vector<8x1xf32>
    %95 = vector.broadcast %94 : vector<8x1xf32> to vector<8x32xf32>
    %96 = arith.subf %86, %95 : vector<8x32xf32>
    %97 = vector.broadcast %94 : vector<8x1xf32> to vector<8x32xf32>
    %98 = arith.subf %86, %97 : vector<8x32xf32>
    %99 = arith.mulf %96, %98 : vector<8x32xf32>
    %cst_46 = arith.constant dense<0.000000e+00> : vector<8xf32>
    %100 = vector.multi_reduction <add>, %99, %cst_46 [1] : vector<8x32xf32> to vector<8xf32>
    %101 = vector.shape_cast %100 : vector<8xf32> to vector<8x1xf32>
    %cst_47 = arith.constant 3.200000e+01 : f32
    %102 = vector.broadcast %cst_47 : f32 to vector<8x1xf32>
    %103 = arith.divf %101, %102 : vector<8x1xf32>
    %104 = vector.broadcast %94 : vector<8x1xf32> to vector<8x32xf32>
    %105 = arith.subf %86, %104 : vector<8x32xf32>
    %cst_48 = arith.constant 9.99999996E-13 : f32
    %106 = vector.broadcast %cst_48 : f32 to vector<8x1xf32>
    %107 = arith.addf %103, %106 : vector<8x1xf32>
    %108 = math.rsqrt %107 : vector<8x1xf32>
    %109 = vector.broadcast %108 : vector<8x1xf32> to vector<8x32xf32>
    %110 = arith.mulf %105, %109 : vector<8x32xf32>
    %111 = vector.broadcast %88 : vector<1x32xf32> to vector<8x32xf32>
    %112 = arith.mulf %110, %111 : vector<8x32xf32>
    %113 = vector.broadcast %90 : vector<1x32xf32> to vector<8x32xf32>
    %114 = arith.addf %112, %113 : vector<8x32xf32>
    %c0_49 = arith.constant 0 : index
    %c0_50 = arith.constant 0 : index
    %c0_51 = arith.constant 0 : index
    %115 = vector.load %arg11[%c0_49, %c0_50, %c0_51] : memref<2x32x64xf32, #tpu.memory_space<vmem>>, vector<1x32x64xf32>
    %116 = vector.shape_cast %115 : vector<1x32x64xf32> to vector<32x64xf32>
    %cst_52 = arith.constant dense<0.000000e+00> : vector<8x64xf32>
    %117 = tpu.matmul %114, %116, %cst_52 {dimension_numbers = #tpu.dot_dimension_numbers<[1], [0], [0], [1], [0, 0, 1, 1], [], []>} : vector<8x32xf32>, vector<32x64xf32>, vector<8x64xf32> -> vector<8x64xf32>
    %c0_53 = arith.constant 0 : index
    %c0_54 = arith.constant 0 : index
    %c0_55 = arith.constant 0 : index
    %118 = vector.load %arg12[%c0_53, %c0_54, %c0_55] : memref<2x1x64xf32, #tpu.memory_space<vmem>>, vector<1x1x64xf32>
    %119 = vector.shape_cast %118 : vector<1x1x64xf32> to vector<1x64xf32>
    %120 = vector.broadcast %119 : vector<1x64xf32> to vector<8x64xf32>
    %121 = arith.addf %117, %120 : vector<8x64xf32>
    %cst_56 = arith.constant 5.000000e-01 : f32
    %122 = vector.broadcast %cst_56 : f32 to vector<8x64xf32>
    %123 = arith.mulf %122, %121 : vector<8x64xf32>
    %cst_57 = arith.constant 4.471500e-02 : f32
    %124 = vector.broadcast %cst_57 : f32 to vector<8x64xf32>
    %125 = arith.mulf %124, %121 : vector<8x64xf32>
    %126 = arith.mulf %125, %121 : vector<8x64xf32>
    %127 = arith.mulf %126, %121 : vector<8x64xf32>
    %128 = arith.addf %121, %127 : vector<8x64xf32>
    %cst_58 = arith.constant 0.797884583 : f32
    %129 = vector.broadcast %cst_58 : f32 to vector<8x64xf32>
    %130 = arith.mulf %129, %128 : vector<8x64xf32>
    %131 = math.tanh %130 : vector<8x64xf32>
    %cst_59 = arith.constant 1.000000e+00 : f32
    %132 = vector.broadcast %cst_59 : f32 to vector<8x64xf32>
    %133 = arith.addf %132, %131 : vector<8x64xf32>
    %134 = arith.mulf %123, %133 : vector<8x64xf32>
    %c0_60 = arith.constant 0 : index
    %c0_61 = arith.constant 0 : index
    %c0_62 = arith.constant 0 : index
    %135 = vector.load %arg13[%c0_60, %c0_61, %c0_62] : memref<2x64x32xf32, #tpu.memory_space<vmem>>, vector<1x64x32xf32>
    %136 = vector.shape_cast %135 : vector<1x64x32xf32> to vector<64x32xf32>
    %cst_63 = arith.constant dense<0.000000e+00> : vector<8x32xf32>
    %137 = tpu.matmul %134, %136, %cst_63 {dimension_numbers = #tpu.dot_dimension_numbers<[1], [0], [0], [1], [0, 0, 1, 1], [], []>} : vector<8x64xf32>, vector<64x32xf32>, vector<8x32xf32> -> vector<8x32xf32>
    %c0_64 = arith.constant 0 : index
    %c0_65 = arith.constant 0 : index
    %c0_66 = arith.constant 0 : index
    %138 = vector.load %arg14[%c0_64, %c0_65, %c0_66] : memref<2x1x32xf32, #tpu.memory_space<vmem>>, vector<1x1x32xf32>
    %139 = vector.shape_cast %138 : vector<1x1x32xf32> to vector<1x32xf32>
    %140 = vector.broadcast %139 : vector<1x32xf32> to vector<8x32xf32>
    %141 = arith.addf %137, %140 : vector<8x32xf32>
    %142 = arith.addf %141, %114 : vector<8x32xf32>
    %c0_67 = arith.constant 0 : index
    %c0_68 = arith.constant 0 : index
    %c0_69 = arith.constant 0 : index
    %143 = vector.load %arg15[%c0_67, %c0_68, %c0_69] : memref<2x1x32xf32, #tpu.memory_space<vmem>>, vector<1x1x32xf32>
    %144 = vector.shape_cast %143 : vector<1x1x32xf32> to vector<1x32xf32>
    %c0_70 = arith.constant 0 : index
    %c0_71 = arith.constant 0 : index
    %c0_72 = arith.constant 0 : index
    %145 = vector.load %arg16[%c0_70, %c0_71, %c0_72] : memref<2x1x32xf32, #tpu.memory_space<vmem>>, vector<1x1x32xf32>
    %146 = vector.shape_cast %145 : vector<1x1x32xf32> to vector<1x32xf32>
    %cst_73 = arith.constant dense<0.000000e+00> : vector<8xf32>
    %147 = vector.multi_reduction <add>, %142, %cst_73 [1] : vector<8x32xf32> to vector<8xf32>
    %148 = vector.shape_cast %147 : vector<8xf32> to vector<8x1xf32>
    %cst_74 = arith.constant 3.200000e+01 : f32
    %149 = vector.broadcast %cst_74 : f32 to vector<8x1xf32>
    %150 = arith.divf %148, %149 : vector<8x1xf32>
    %151 = vector.broadcast %150 : vector<8x1xf32> to vector<8x32xf32>
    %152 = arith.subf %142, %151 : vector<8x32xf32>
    %153 = vector.broadcast %150 : vector<8x1xf32> to vector<8x32xf32>
    %154 = arith.subf %142, %153 : vector<8x32xf32>
    %155 = arith.mulf %152, %154 : vector<8x32xf32>
    %cst_75 = arith.constant dense<0.000000e+00> : vector<8xf32>
    %156 = vector.multi_reduction <add>, %155, %cst_75 [1] : vector<8x32xf32> to vector<8xf32>
    %157 = vector.shape_cast %156 : vector<8xf32> to vector<8x1xf32>
    %cst_76 = arith.constant 3.200000e+01 : f32
    %158 = vector.broadcast %cst_76 : f32 to vector<8x1xf32>
    %159 = arith.divf %157, %158 : vector<8x1xf32>
    %160 = vector.broadcast %150 : vector<8x1xf32> to vector<8x32xf32>
    %161 = arith.subf %142, %160 : vector<8x32xf32>
    %cst_77 = arith.constant 9.99999996E-13 : f32
    %162 = vector.broadcast %cst_77 : f32 to vector<8x1xf32>
    %163 = arith.addf %159, %162 : vector<8x1xf32>
    %164 = math.rsqrt %163 : vector<8x1xf32>
    %165 = vector.broadcast %164 : vector<8x1xf32> to vector<8x32xf32>
    %166 = arith.mulf %161, %165 : vector<8x32xf32>
    %167 = vector.broadcast %144 : vector<1x32xf32> to vector<8x32xf32>
    %168 = arith.mulf %166, %167 : vector<8x32xf32>
    %169 = vector.broadcast %146 : vector<1x32xf32> to vector<8x32xf32>
    %170 = arith.addf %168, %169 : vector<8x32xf32>
    %c1 = arith.constant 1 : index
    %c0_78 = arith.constant 0 : index
    %c0_79 = arith.constant 0 : index
    %171 = vector.load %arg5[%c1, %c0_78, %c0_79] : memref<2x32x96xf32, #tpu.memory_space<vmem>>, vector<1x32x96xf32>
    %172 = vector.shape_cast %171 : vector<1x32x96xf32> to vector<32x96xf32>
    %cst_80 = arith.constant dense<0.000000e+00> : vector<8x96xf32>
    %173 = tpu.matmul %170, %172, %cst_80 {dimension_numbers = #tpu.dot_dimension_numbers<[1], [0], [0], [1], [0, 0, 1, 1], [], []>} : vector<8x32xf32>, vector<32x96xf32>, vector<8x96xf32> -> vector<8x96xf32>
    %c1_81 = arith.constant 1 : index
    %c0_82 = arith.constant 0 : index
    %c0_83 = arith.constant 0 : index
    %174 = vector.load %arg6[%c1_81, %c0_82, %c0_83] : memref<2x1x96xf32, #tpu.memory_space<vmem>>, vector<1x1x96xf32>
    %175 = vector.shape_cast %174 : vector<1x1x96xf32> to vector<1x96xf32>
    %176 = vector.broadcast %175 : vector<1x96xf32> to vector<8x96xf32>
    %177 = arith.addf %173, %176 : vector<8x96xf32>
    %c1_84 = arith.constant 1 : index
    %c0_85 = arith.constant 0 : index
    %c0_86 = arith.constant 0 : index
    %178 = vector.load %arg7[%c1_84, %c0_85, %c0_86] : memref<2x32x32xf32, #tpu.memory_space<vmem>>, vector<1x32x32xf32>
    %179 = vector.shape_cast %178 : vector<1x32x32xf32> to vector<32x32xf32>
    %c1_87 = arith.constant 1 : index
    %c0_88 = arith.constant 0 : index
    %c0_89 = arith.constant 0 : index
    %180 = vector.load %arg8[%c1_87, %c0_88, %c0_89] : memref<2x1x32xf32, #tpu.memory_space<vmem>>, vector<1x1x32xf32>
    %181 = vector.shape_cast %180 : vector<1x1x32xf32> to vector<1x32xf32>
    %182 = vector.extract_strided_slice %177 {offsets = [0, 0], sizes = [8, 16], strides = [1, 1]} : vector<8x96xf32> to vector<8x16xf32>
    %183 = vector.extract_strided_slice %177 {offsets = [0, 32], sizes = [8, 16], strides = [1, 1]} : vector<8x96xf32> to vector<8x16xf32>
    %184 = vector.extract_strided_slice %177 {offsets = [0, 64], sizes = [8, 16], strides = [1, 1]} : vector<8x96xf32> to vector<8x16xf32>
    %cst_90 = arith.constant dense<0.000000e+00> : vector<8x8xf32>
    %185 = tpu.matmul %182, %183, %cst_90 {dimension_numbers = #tpu.dot_dimension_numbers<[1], [1], [0], [0], [0, 0, 1, 0], [], []>} : vector<8x16xf32>, vector<8x16xf32>, vector<8x8xf32> -> vector<8x8xf32>
    %cst_91 = arith.constant 2.500000e-01 : f32
    %186 = vector.broadcast %cst_91 : f32 to vector<8x8xf32>
    %187 = arith.mulf %185, %186 : vector<8x8xf32>
    %188 = vector.broadcast %3 : vector<1x8xf32> to vector<8x8xf32>
    %189 = arith.addf %187, %188 : vector<8x8xf32>
    %cst_92 = arith.constant dense<0xFF800000> : vector<8xf32>
    %190 = vector.multi_reduction <maximumf>, %189, %cst_92 [1] : vector<8x8xf32> to vector<8xf32>
    %191 = vector.shape_cast %190 : vector<8xf32> to vector<8x1xf32>
    %192 = vector.broadcast %191 : vector<8x1xf32> to vector<8x8xf32>
    %193 = arith.subf %189, %192 : vector<8x8xf32>
    %194 = math.exp %193 : vector<8x8xf32>
    %cst_93 = arith.constant dense<0.000000e+00> : vector<8xf32>
    %195 = vector.multi_reduction <add>, %194, %cst_93 [1] : vector<8x8xf32> to vector<8xf32>
    %196 = vector.shape_cast %195 : vector<8xf32> to vector<8x1xf32>
    %197 = tpu.reciprocal %196 {approx = true} : vector<8x1xf32> -> vector<8x1xf32>
    %198 = vector.broadcast %197 : vector<8x1xf32> to vector<8x8xf32>
    %199 = arith.mulf %194, %198 : vector<8x8xf32>
    %cst_94 = arith.constant dense<0.000000e+00> : vector<8x16xf32>
    %200 = tpu.matmul %199, %184, %cst_94 {dimension_numbers = #tpu.dot_dimension_numbers<[1], [0], [0], [1], [0, 0, 1, 1], [], []>} : vector<8x8xf32>, vector<8x16xf32>, vector<8x16xf32> -> vector<8x16xf32>
    %201 = vector.extract_strided_slice %179 {offsets = [0, 0], sizes = [16, 32], strides = [1, 1]} : vector<32x32xf32> to vector<16x32xf32>
    %cst_95 = arith.constant dense<0.000000e+00> : vector<8x32xf32>
    %202 = tpu.matmul %200, %201, %cst_95 {dimension_numbers = #tpu.dot_dimension_numbers<[1], [0], [0], [1], [0, 0, 1, 1], [], []>} : vector<8x16xf32>, vector<16x32xf32>, vector<8x32xf32> -> vector<8x32xf32>
    %203 = vector.broadcast %181 : vector<1x32xf32> to vector<8x32xf32>
    %204 = arith.addf %203, %202 : vector<8x32xf32>
    %205 = vector.extract_strided_slice %177 {offsets = [0, 16], sizes = [8, 16], strides = [1, 1]} : vector<8x96xf32> to vector<8x16xf32>
    %206 = vector.extract_strided_slice %177 {offsets = [0, 48], sizes = [8, 16], strides = [1, 1]} : vector<8x96xf32> to vector<8x16xf32>
    %207 = vector.extract_strided_slice %177 {offsets = [0, 80], sizes = [8, 16], strides = [1, 1]} : vector<8x96xf32> to vector<8x16xf32>
    %cst_96 = arith.constant dense<0.000000e+00> : vector<8x8xf32>
    %208 = tpu.matmul %205, %206, %cst_96 {dimension_numbers = #tpu.dot_dimension_numbers<[1], [1], [0], [0], [0, 0, 1, 0], [], []>} : vector<8x16xf32>, vector<8x16xf32>, vector<8x8xf32> -> vector<8x8xf32>
    %cst_97 = arith.constant 2.500000e-01 : f32
    %209 = vector.broadcast %cst_97 : f32 to vector<8x8xf32>
    %210 = arith.mulf %208, %209 : vector<8x8xf32>
    %211 = vector.broadcast %3 : vector<1x8xf32> to vector<8x8xf32>
    %212 = arith.addf %210, %211 : vector<8x8xf32>
    %cst_98 = arith.constant dense<0xFF800000> : vector<8xf32>
    %213 = vector.multi_reduction <maximumf>, %212, %cst_98 [1] : vector<8x8xf32> to vector<8xf32>
    %214 = vector.shape_cast %213 : vector<8xf32> to vector<8x1xf32>
    %215 = vector.broadcast %214 : vector<8x1xf32> to vector<8x8xf32>
    %216 = arith.subf %212, %215 : vector<8x8xf32>
    %217 = math.exp %216 : vector<8x8xf32>
    %cst_99 = arith.constant dense<0.000000e+00> : vector<8xf32>
    %218 = vector.multi_reduction <add>, %217, %cst_99 [1] : vector<8x8xf32> to vector<8xf32>
    %219 = vector.shape_cast %218 : vector<8xf32> to vector<8x1xf32>
    %220 = tpu.reciprocal %219 {approx = true} : vector<8x1xf32> -> vector<8x1xf32>
    %221 = vector.broadcast %220 : vector<8x1xf32> to vector<8x8xf32>
    %222 = arith.mulf %217, %221 : vector<8x8xf32>
    %cst_100 = arith.constant dense<0.000000e+00> : vector<8x16xf32>
    %223 = tpu.matmul %222, %207, %cst_100 {dimension_numbers = #tpu.dot_dimension_numbers<[1], [0], [0], [1], [0, 0, 1, 1], [], []>} : vector<8x8xf32>, vector<8x16xf32>, vector<8x16xf32> -> vector<8x16xf32>
    %224 = vector.extract_strided_slice %179 {offsets = [16, 0], sizes = [16, 32], strides = [1, 1]} : vector<32x32xf32> to vector<16x32xf32>
    %cst_101 = arith.constant dense<0.000000e+00> : vector<8x32xf32>
    %225 = tpu.matmul %223, %224, %cst_101 {dimension_numbers = #tpu.dot_dimension_numbers<[1], [0], [0], [1], [0, 0, 1, 1], [], []>} : vector<8x16xf32>, vector<16x32xf32>, vector<8x32xf32> -> vector<8x32xf32>
    %226 = arith.addf %204, %225 : vector<8x32xf32>
    %227 = arith.addf %226, %170 : vector<8x32xf32>
    %c1_102 = arith.constant 1 : index
    %c0_103 = arith.constant 0 : index
    %c0_104 = arith.constant 0 : index
    %228 = vector.load %arg9[%c1_102, %c0_103, %c0_104] : memref<2x1x32xf32, #tpu.memory_space<vmem>>, vector<1x1x32xf32>
    %229 = vector.shape_cast %228 : vector<1x1x32xf32> to vector<1x32xf32>
    %c1_105 = arith.constant 1 : index
    %c0_106 = arith.constant 0 : index
    %c0_107 = arith.constant 0 : index
    %230 = vector.load %arg10[%c1_105, %c0_106, %c0_107] : memref<2x1x32xf32, #tpu.memory_space<vmem>>, vector<1x1x32xf32>
    %231 = vector.shape_cast %230 : vector<1x1x32xf32> to vector<1x32xf32>
    %cst_108 = arith.constant dense<0.000000e+00> : vector<8xf32>
    %232 = vector.multi_reduction <add>, %227, %cst_108 [1] : vector<8x32xf32> to vector<8xf32>
    %233 = vector.shape_cast %232 : vector<8xf32> to vector<8x1xf32>
    %cst_109 = arith.constant 3.200000e+01 : f32
    %234 = vector.broadcast %cst_109 : f32 to vector<8x1xf32>
    %235 = arith.divf %233, %234 : vector<8x1xf32>
    %236 = vector.broadcast %235 : vector<8x1xf32> to vector<8x32xf32>
    %237 = arith.subf %227, %236 : vector<8x32xf32>
    %238 = vector.broadcast %235 : vector<8x1xf32> to vector<8x32xf32>
    %239 = arith.subf %227, %238 : vector<8x32xf32>
    %240 = arith.mulf %237, %239 : vector<8x32xf32>
    %cst_110 = arith.constant dense<0.000000e+00> : vector<8xf32>
    %241 = vector.multi_reduction <add>, %240, %cst_110 [1] : vector<8x32xf32> to vector<8xf32>
    %242 = vector.shape_cast %241 : vector<8xf32> to vector<8x1xf32>
    %cst_111 = arith.constant 3.200000e+01 : f32
    %243 = vector.broadcast %cst_111 : f32 to vector<8x1xf32>
    %244 = arith.divf %242, %243 : vector<8x1xf32>
    %245 = vector.broadcast %235 : vector<8x1xf32> to vector<8x32xf32>
    %246 = arith.subf %227, %245 : vector<8x32xf32>
    %cst_112 = arith.constant 9.99999996E-13 : f32
    %247 = vector.broadcast %cst_112 : f32 to vector<8x1xf32>
    %248 = arith.addf %244, %247 : vector<8x1xf32>
    %249 = math.rsqrt %248 : vector<8x1xf32>
    %250 = vector.broadcast %249 : vector<8x1xf32> to vector<8x32xf32>
    %251 = arith.mulf %246, %250 : vector<8x32xf32>
    %252 = vector.broadcast %229 : vector<1x32xf32> to vector<8x32xf32>
    %253 = arith.mulf %251, %252 : vector<8x32xf32>
    %254 = vector.broadcast %231 : vector<1x32xf32> to vector<8x32xf32>
    %255 = arith.addf %253, %254 : vector<8x32xf32>
    %c1_113 = arith.constant 1 : index
    %c0_114 = arith.constant 0 : index
    %c0_115 = arith.constant 0 : index
    %256 = vector.load %arg11[%c1_113, %c0_114, %c0_115] : memref<2x32x64xf32, #tpu.memory_space<vmem>>, vector<1x32x64xf32>
    %257 = vector.shape_cast %256 : vector<1x32x64xf32> to vector<32x64xf32>
    %cst_116 = arith.constant dense<0.000000e+00> : vector<8x64xf32>
    %258 = tpu.matmul %255, %257, %cst_116 {dimension_numbers = #tpu.dot_dimension_numbers<[1], [0], [0], [1], [0, 0, 1, 1], [], []>} : vector<8x32xf32>, vector<32x64xf32>, vector<8x64xf32> -> vector<8x64xf32>
    %c1_117 = arith.constant 1 : index
    %c0_118 = arith.constant 0 : index
    %c0_119 = arith.constant 0 : index
    %259 = vector.load %arg12[%c1_117, %c0_118, %c0_119] : memref<2x1x64xf32, #tpu.memory_space<vmem>>, vector<1x1x64xf32>
    %260 = vector.shape_cast %259 : vector<1x1x64xf32> to vector<1x64xf32>
    %261 = vector.broadcast %260 : vector<1x64xf32> to vector<8x64xf32>
    %262 = arith.addf %258, %261 : vector<8x64xf32>
    %cst_120 = arith.constant 5.000000e-01 : f32
    %263 = vector.broadcast %cst_120 : f32 to vector<8x64xf32>
    %264 = arith.mulf %263, %262 : vector<8x64xf32>
    %cst_121 = arith.constant 4.471500e-02 : f32
    %265 = vector.broadcast %cst_121 : f32 to vector<8x64xf32>
    %266 = arith.mulf %265, %262 : vector<8x64xf32>
    %267 = arith.mulf %266, %262 : vector<8x64xf32>
    %268 = arith.mulf %267, %262 : vector<8x64xf32>
    %269 = arith.addf %262, %268 : vector<8x64xf32>
    %cst_122 = arith.constant 0.797884583 : f32
    %270 = vector.broadcast %cst_122 : f32 to vector<8x64xf32>
    %271 = arith.mulf %270, %269 : vector<8x64xf32>
    %272 = math.tanh %271 : vector<8x64xf32>
    %cst_123 = arith.constant 1.000000e+00 : f32
    %273 = vector.broadcast %cst_123 : f32 to vector<8x64xf32>
    %274 = arith.addf %273, %272 : vector<8x64xf32>
    %275 = arith.mulf %264, %274 : vector<8x64xf32>
    %c1_124 = arith.constant 1 : index
    %c0_125 = arith.constant 0 : index
    %c0_126 = arith.constant 0 : index
    %276 = vector.load %arg13[%c1_124, %c0_125, %c0_126] : memref<2x64x32xf32, #tpu.memory_space<vmem>>, vector<1x64x32xf32>
    %277 = vector.shape_cast %276 : vector<1x64x32xf32> to vector<64x32xf32>
    %cst_127 = arith.constant dense<0.000000e+00> : vector<8x32xf32>
    %278 = tpu.matmul %275, %277, %cst_127 {dimension_numbers = #tpu.dot_dimension_numbers<[1], [0], [0], [1], [0, 0, 1, 1], [], []>} : vector<8x64xf32>, vector<64x32xf32>, vector<8x32xf32> -> vector<8x32xf32>
    %c1_128 = arith.constant 1 : index
    %c0_129 = arith.constant 0 : index
    %c0_130 = arith.constant 0 : index
    %279 = vector.load %arg14[%c1_128, %c0_129, %c0_130] : memref<2x1x32xf32, #tpu.memory_space<vmem>>, vector<1x1x32xf32>
    %280 = vector.shape_cast %279 : vector<1x1x32xf32> to vector<1x32xf32>
    %281 = vector.broadcast %280 : vector<1x32xf32> to vector<8x32xf32>
    %282 = arith.addf %278, %281 : vector<8x32xf32>
    %283 = arith.addf %282, %255 : vector<8x32xf32>
    %c1_131 = arith.constant 1 : index
    %c0_132 = arith.constant 0 : index
    %c0_133 = arith.constant 0 : index
    %284 = vector.load %arg15[%c1_131, %c0_132, %c0_133] : memref<2x1x32xf32, #tpu.memory_space<vmem>>, vector<1x1x32xf32>
    %285 = vector.shape_cast %284 : vector<1x1x32xf32> to vector<1x32xf32>
    %c1_134 = arith.constant 1 : index
    %c0_135 = arith.constant 0 : index
    %c0_136 = arith.constant 0 : index
    %286 = vector.load %arg16[%c1_134, %c0_135, %c0_136] : memref<2x1x32xf32, #tpu.memory_space<vmem>>, vector<1x1x32xf32>
    %287 = vector.shape_cast %286 : vector<1x1x32xf32> to vector<1x32xf32>
    %cst_137 = arith.constant dense<0.000000e+00> : vector<8xf32>
    %288 = vector.multi_reduction <add>, %283, %cst_137 [1] : vector<8x32xf32> to vector<8xf32>
    %289 = vector.shape_cast %288 : vector<8xf32> to vector<8x1xf32>
    %cst_138 = arith.constant 3.200000e+01 : f32
    %290 = vector.broadcast %cst_138 : f32 to vector<8x1xf32>
    %291 = arith.divf %289, %290 : vector<8x1xf32>
    %292 = vector.broadcast %291 : vector<8x1xf32> to vector<8x32xf32>
    %293 = arith.subf %283, %292 : vector<8x32xf32>
    %294 = vector.broadcast %291 : vector<8x1xf32> to vector<8x32xf32>
    %295 = arith.subf %283, %294 : vector<8x32xf32>
    %296 = arith.mulf %293, %295 : vector<8x32xf32>
    %cst_139 = arith.constant dense<0.000000e+00> : vector<8xf32>
    %297 = vector.multi_reduction <add>, %296, %cst_139 [1] : vector<8x32xf32> to vector<8xf32>
    %298 = vector.shape_cast %297 : vector<8xf32> to vector<8x1xf32>
    %cst_140 = arith.constant 3.200000e+01 : f32
    %299 = vector.broadcast %cst_140 : f32 to vector<8x1xf32>
    %300 = arith.divf %298, %299 : vector<8x1xf32>
    %301 = vector.broadcast %291 : vector<8x1xf32> to vector<8x32xf32>
    %302 = arith.subf %283, %301 : vector<8x32xf32>
    %cst_141 = arith.constant 9.99999996E-13 : f32
    %303 = vector.broadcast %cst_141 : f32 to vector<8x1xf32>
    %304 = arith.addf %300, %303 : vector<8x1xf32>
    %305 = math.rsqrt %304 : vector<8x1xf32>
    %306 = vector.broadcast %305 : vector<8x1xf32> to vector<8x32xf32>
    %307 = arith.mulf %302, %306 : vector<8x32xf32>
    %308 = vector.broadcast %285 : vector<1x32xf32> to vector<8x32xf32>
    %309 = arith.mulf %307, %308 : vector<8x32xf32>
    %310 = vector.broadcast %287 : vector<1x32xf32> to vector<8x32xf32>
    %311 = arith.addf %309, %310 : vector<8x32xf32>
    %312 = vector.extract_strided_slice %311 {offsets = [0, 0], sizes = [1, 32], strides = [1, 1]} : vector<8x32xf32> to vector<1x32xf32>
    %c0_142 = arith.constant 0 : index
    %c0_143 = arith.constant 0 : index
    %c0_144 = arith.constant 0 : index
    %313 = vector.load %arg19[%c0_142, %c0_143, %c0_144] : memref<1x1x32xf32, #tpu.memory_space<vmem>>, vector<1x1x32xf32>
    %314 = vector.shape_cast %313 : vector<1x1x32xf32> to vector<1x32xf32>
    %315 = vector.shape_cast %312 : vector<1x32xf32> to vector<1x1x32xf32>
    tpu.vector_store %arg19[%c0_142, %c0_143, %c0_144], %315 {strides = array<i32>} : memref<1x1x32xf32, #tpu.memory_space<vmem>>, vector<1x1x32xf32>,
    return
  }
  func.func @transform_0(%arg0: i32) -> (i32, i32, i32) {
    %c0_i32 = arith.constant 0 : i32
    %c0_i32_0 = arith.constant 0 : i32
    %c0_i32_1 = arith.constant 0 : i32
    return %arg0, %c0_i32, %c0_i32_0 : i32, i32, i32
  }
  func.func @transform_1(%arg0: i32) -> (i32, i32, i32) {
    %c0_i32 = arith.constant 0 : i32
    %c0_i32_0 = arith.constant 0 : i32
    %c0_i32_1 = arith.constant 0 : i32
    return %arg0, %c0_i32, %c0_i32_0 : i32, i32, i32
  }
  func.func @transform_2(%arg0: i32) -> (i32, i32) {
    %c0_i32 = arith.constant 0 : i32
    %c0_i32_0 = arith.constant 0 : i32
    %c0_i32_1 = arith.constant 0 : i32
    return %c0_i32, %c0_i32_0 : i32, i32
  }
  func.func @transform_3(%arg0: i32) -> (i32, i32) {
    %c0_i32 = arith.constant 0 : i32
    %c0_i32_0 = arith.constant 0 : i32
    %c0_i32_1 = arith.constant 0 : i32
    return %c0_i32, %c0_i32_0 : i32, i32
  }
  func.func @transform_4(%arg0: i32) -> (i32, i32, i32) {
    %c0_i32 = arith.constant 0 : i32
    %c0_i32_0 = arith.constant 0 : i32
    %c0_i32_1 = arith.constant 0 : i32
    %c0_i32_2 = arith.constant 0 : i32
    return %c0_i32, %c0_i32_0, %c0_i32_1 : i32, i32, i32
  }
  func.func @transform_5(%arg0: i32) -> (i32, i32, i32) {
    %c0_i32 = arith.constant 0 : i32
    %c0_i32_0 = arith.constant 0 : i32
    %c0_i32_1 = arith.constant 0 : i32
    %c0_i32_2 = arith.constant 0 : i32
    return %c0_i32, %c0_i32_0, %c0_i32_1 : i32, i32, i32
  }
  func.func @transform_6(%arg0: i32) -> (i32, i32, i32) {
    %c0_i32 = arith.constant 0 : i32
    %c0_i32_0 = arith.constant 0 : i32
    %c0_i32_1 = arith.constant 0 : i32
    %c0_i32_2 = arith.constant 0 : i32
    return %c0_i32, %c0_i32_0, %c0_i32_1 : i32, i32, i32
  }
  func.func @transform_7(%arg0: i32) -> (i32, i32, i32) {
    %c0_i32 = arith.constant 0 : i32
    %c0_i32_0 = arith.constant 0 : i32
    %c0_i32_1 = arith.constant 0 : i32
    %c0_i32_2 = arith.constant 0 : i32
    return %c0_i32, %c0_i32_0, %c0_i32_1 : i32, i32, i32
  }
  func.func @transform_8(%arg0: i32) -> (i32, i32, i32) {
    %c0_i32 = arith.constant 0 : i32
    %c0_i32_0 = arith.constant 0 : i32
    %c0_i32_1 = arith.constant 0 : i32
    %c0_i32_2 = arith.constant 0 : i32
    return %c0_i32, %c0_i32_0, %c0_i32_1 : i32, i32, i32
  }
  func.func @transform_9(%arg0: i32) -> (i32, i32, i32) {
    %c0_i32 = arith.constant 0 : i32
    %c0_i32_0 = arith.constant 0 : i32
    %c0_i32_1 = arith.constant 0 : i32
    %c0_i32_2 = arith.constant 0 : i32
    return %c0_i32, %c0_i32_0, %c0_i32_1 : i32, i32, i32
  }
  func.func @transform_10(%arg0: i32) -> (i32, i32, i32) {
    %c0_i32 = arith.constant 0 : i32
    %c0_i32_0 = arith.constant 0 : i32
    %c0_i32_1 = arith.constant 0 : i32
    %c0_i32_2 = arith.constant 0 : i32
    return %c0_i32, %c0_i32_0, %c0_i32_1 : i32, i32, i32
  }
  func.func @transform_11(%arg0: i32) -> (i32, i32, i32) {
    %c0_i32 = arith.constant 0 : i32
    %c0_i32_0 = arith.constant 0 : i32
    %c0_i32_1 = arith.constant 0 : i32
    %c0_i32_2 = arith.constant 0 : i32
    return %c0_i32, %c0_i32_0, %c0_i32_1 : i32, i32, i32
  }
  func.func @transform_12(%arg0: i32) -> (i32, i32, i32) {
    %c0_i32 = arith.constant 0 : i32
    %c0_i32_0 = arith.constant 0 : i32
    %c0_i32_1 = arith.constant 0 : i32
    %c0_i32_2 = arith.constant 0 : i32
    return %c0_i32, %c0_i32_0, %c0_i32_1 : i32, i32, i32
  }
  func.func @transform_13(%arg0: i32) -> (i32, i32, i32) {
    %c0_i32 = arith.constant 0 : i32
    %c0_i32_0 = arith.constant 0 : i32
    %c0_i32_1 = arith.constant 0 : i32
    %c0_i32_2 = arith.constant 0 : i32
    return %c0_i32, %c0_i32_0, %c0_i32_1 : i32, i32, i32
  }
  func.func @transform_14(%arg0: i32) -> (i32, i32, i32) {
    %c0_i32 = arith.constant 0 : i32
    %c0_i32_0 = arith.constant 0 : i32
    %c0_i32_1 = arith.constant 0 : i32
    %c0_i32_2 = arith.constant 0 : i32
    return %c0_i32, %c0_i32_0, %c0_i32_1 : i32, i32, i32
  }
  func.func @transform_15(%arg0: i32) -> (i32, i32, i32) {
    %c0_i32 = arith.constant 0 : i32
    %c0_i32_0 = arith.constant 0 : i32
    %c0_i32_1 = arith.constant 0 : i32
    %c0_i32_2 = arith.constant 0 : i32
    return %c0_i32, %c0_i32_0, %c0_i32_1 : i32, i32, i32
  }
  func.func @transform_16(%arg0: i32) -> (i32, i32) {
    %c0_i32 = arith.constant 0 : i32
    %c0_i32_0 = arith.constant 0 : i32
    %c0_i32_1 = arith.constant 0 : i32
    return %c0_i32, %c0_i32_0 : i32, i32
  }
  func.func @transform_17(%arg0: i32) -> (i32, i32) {
    %c0_i32 = arith.constant 0 : i32
    %c0_i32_0 = arith.constant 0 : i32
    %c0_i32_1 = arith.constant 0 : i32
    return %c0_i32, %c0_i32_0 : i32, i32
  }
  func.func @transform_18(%arg0: i32) -> (i32, i32, i32) {
    %c0_i32 = arith.constant 0 : i32
    %c0_i32_0 = arith.constant 0 : i32
    %c0_i32_1 = arith.constant 0 : i32
    return %arg0, %c0_i32, %c0_i32_0 : i32, i32, i32
  }
}

</mosaic_0001>

<llo_original>
// kernel: simcse_forward.1
$region0: #{simcse_forward.1}
  #allocation0 [shape = 'u32[]', space=smem, size = 0x4, offset = 0x4, fixed_abs, tag = 'smem constant byte address 0x4 - core index']
  #allocation1 [shape = 'u32[144,128]{1,0:T(1,128)}', space=vmem, size = 0x12000, scoped, tag = 'internal scratch']
  %s0 = inlined_call_operand.vmem [shape: f32[2,8,32], index: 0, kind: input, shape index: {}]
  %s1 = inlined_call_operand.vmem [shape: f32[2,1,8], index: 1, kind: input, shape index: {}]
  %s2 = inlined_call_operand.vmem [shape: f32[1,32], index: 2, kind: input, shape index: {}]
  %s3 = inlined_call_operand.vmem [shape: f32[1,32], index: 3, kind: input, shape index: {}]
  %s4 = inlined_call_operand.vmem [shape: f32[2,32,96], index: 4, kind: input, shape index: {}]
  %s5 = inlined_call_operand.vmem [shape: f32[2,1,96], index: 5, kind: input, shape index: {}]
  %s6 = inlined_call_operand.vmem [shape: f32[2,32,32], index: 6, kind: input, shape index: {}]
  %s7 = inlined_call_operand.vmem [shape: f32[2,1,32], index: 7, kind: input, shape index: {}]
  %s8 = inlined_call_operand.vmem [shape: f32[2,1,32], index: 8, kind: input, shape index: {}]
  %s9 = inlined_call_operand.vmem [shape: f32[2,1,32], index: 9, kind: input, shape index: {}]
  %s10 = inlined_call_operand.vmem [shape: f32[2,32,64], index: 10, kind: input, shape index: {}]
  %s11 = inlined_call_operand.vmem [shape: f32[2,1,64], index: 11, kind: input, shape index: {}]
  %s12 = inlined_call_operand.vmem [shape: f32[2,64,32], index: 12, kind: input, shape index: {}]
  %s13 = inlined_call_operand.vmem [shape: f32[2,1,32], index: 13, kind: input, shape index: {}]
  %s14 = inlined_call_operand.vmem [shape: f32[2,1,32], index: 14, kind: input, shape index: {}]
  %s15 = inlined_call_operand.vmem [shape: f32[2,1,32], index: 15, kind: input, shape index: {}]
  %s16 = inlined_call_operand.vmem [shape: f32[32,32], index: 16, kind: input, shape index: {}]
  %s17 = inlined_call_operand.vmem [shape: f32[1,32], index: 17, kind: input, shape index: {}]
  %s18 = inlined_call_operand.hbm [shape: f32[2,1,32], index: 18, kind: output, shape index: {}]
  %s19 = sld [smem:[#allocation0]]
  $region105: #{simcse_forward.1} parent=0
    _
  %s21 = ssub.s32 1, %s19
  %s22 = scalar_select 0, %s21, %s19
  $region1: #{simcse_forward.1} parent=0
    #allocation2 [shape = 'u8[1024]{0}', space=vmem, size = 0x400, scoped, tag = 'output window, operand 0']
    #allocation3 [shape = 's32[2]{0}', space=sflag, size = 0x8, scoped, tag = 'scoped memory for simcse_forward.1']
    %23 = vsyncpa [#allocation3], 0
    %s24 = scalar_lea.sflag [#allocation3], 1
    %25 = vsyncpa %s24, 0
    loop: start=0, step=1, limit=4
    $region2: #{simcse_forward.1} parent=1 // loop_pre_header
      _
    $region3: #{simcse_forward.1} parent=1 // loop_header
      %s27 = sphi 0, %s31
      %p28 = scmp.ge.s32.totalorder %s27, 4
      %s37 = sphi 0, %s39
      %s40 = sphi 0, %s37
      %s41 = sphi 0, %s40
      %s57 = sphi 0, %s41
      %s63 = sphi 0, %s65
      %s66 = sphi 0, %s63
      %s67 = sphi 0, %s66
      %s83 = sphi 0, %s67
      %s87 = sphi 0, %s87
      %s89 = sphi 0, %s87
      %s90 = sphi 0, %s89
      %s104 = sphi 0, %s90
      %s108 = sphi 0, %s108
      %s110 = sphi 0, %s108
      %s111 = sphi 0, %s110
      %s125 = sphi 0, %s111
      %s129 = sphi 0, %s129
      %s131 = sphi 0, %s129
      %s132 = sphi 0, %s131
      %s146 = sphi 0, %s132
      %s150 = sphi 0, %s150
      %s152 = sphi 0, %s150
      %s153 = sphi 0, %s152
      %s167 = sphi 0, %s153
      %s171 = sphi 0, %s171
      %s173 = sphi 0, %s171
      %s174 = sphi 0, %s173
      %s188 = sphi 0, %s174
      %s192 = sphi 0, %s192
      %s194 = sphi 0, %s192
      %s195 = sphi 0, %s194
      %s209 = sphi 0, %s195
      %s213 = sphi 0, %s213
      %s215 = sphi 0, %s213
      %s216 = sphi 0, %s215
      %s230 = sphi 0, %s216
      %s234 = sphi 0, %s234
      %s236 = sphi 0, %s234
      %s237 = sphi 0, %s236
      %s251 = sphi 0, %s237
      %s255 = sphi 0, %s255
      %s257 = sphi 0, %s255
      %s258 = sphi 0, %s257
      %s272 = sphi 0, %s258
      %s276 = sphi 0, %s276
      %s278 = sphi 0, %s276
      %s279 = sphi 0, %s278
      %s293 = sphi 0, %s279
      %s297 = sphi 0, %s297
      %s299 = sphi 0, %s297
      %s300 = sphi 0, %s299
      %s314 = sphi 0, %s300
      %s318 = sphi 0, %s318
      %s320 = sphi 0, %s318
      %s321 = sphi 0, %s320
      %s335 = sphi 0, %s321
      %s339 = sphi 0, %s339
      %s341 = sphi 0, %s339
      %s342 = sphi 0, %s341
      %s356 = sphi 0, %s342
      %s360 = sphi 0, %s360
      %s362 = sphi 0, %s360
      %s363 = sphi 0, %s362
      %s377 = sphi 0, %s363
      %s381 = sphi 0, %s381
      %s383 = sphi 0, %s381
      %s384 = sphi 0, %s383
      %s398 = sphi 0, %s384
      %s402 = sphi 0, %s402
      %s404 = sphi 0, %s402
      %s405 = sphi 0, %s404
      %s419 = sphi 0, %s405
      %s425 = sphi 0, %s427
      %s428 = sphi 0, %s425
      %s429 = sphi 0, %s428
      %s445 = sphi 0, %s429
    $region4: #{simcse_forward.1} parent=1 // loop_header_branch
      %30 = sbr.rel (%p28) target = $region8
    $region5: #{simcse_forward.1} parent=1 // loop_body
      %s32 = ssub.s32 %s27, 1
      %s33 = ssub.s32 %s27, 2
      %s34 = sadd.s32 %s27, 1
      %s35 = ssub.s32 %s27, %s34
      %p36 = scmp.eq.s32.totalorder %s35, 0
      %s38 = sadd.s32 %s37, 1
      %s39 = scalar_select %p36, %s37, %s38
      %p42 = pneg %p36
      %p43 = scmp.eq.s32.totalorder %s27, 1
      %p44 = por %p42, %p43
      %p45 = scmp.ne.s32.totalorder %s37, %s40
      %p46 = scmp.eq.s32.totalorder %s27, 0
      %p47 = por %p45, %p46
      %p48 = scmp.ne.s32.totalorder %s37, %s40
      %p49 = scmp.eq.s32.totalorder %s32, 1
      %p50 = por %p48, %p49
      %p51 = scmp.ne.s32.totalorder %s40, %s41
      %p52 = scmp.eq.s32.totalorder %s32, 0
      %p53 = por %p51, %p52
      %p54 = scmp.ne.s32.totalorder %s40, %s41
      %p55 = scmp.eq.s32.totalorder %s33, 1
      %p56 = por %p54, %p55
      %p58 = scmp.ne.s32.totalorder %s41, %s57
      %p59 = scmp.eq.s32.totalorder %s33, 0
      %p60 = por %p58, %p59
      %s61 = ssub.s32 %s27, %s34
      %p62 = scmp.eq.s32.totalorder %s61, 0
      %s64 = sadd.s32 %s63, 1
      %s65 = scalar_select %p62, %s63, %s64
      %p68 = pneg %p62
      %p69 = scmp.eq.s32.totalorder %s27, 1
      %p70 = por %p68, %p69
      %p71 = scmp.ne.s32.totalorder %s63, %s66
      %p72 = scmp.eq.s32.totalorder %s27, 0
      %p73 = por %p71, %p72
      %p74 = scmp.ne.s32.totalorder %s63, %s66
      %p75 = scmp.eq.s32.totalorder %s32, 1
      %p76 = por %p74, %p75
      %p77 = scmp.ne.s32.totalorder %s66, %s67
      %p78 = scmp.eq.s32.totalorder %s32, 0
      %p79 = por %p77, %p78
      %p80 = scmp.ne.s32.totalorder %s66, %s67
      %p81 = scmp.eq.s32.totalorder %s33, 1
      %p82 = por %p80, %p81
      %p84 = scmp.ne.s32.totalorder %s67, %s83
      %p85 = scmp.eq.s32.totalorder %s33, 0
      %p86 = por %p84, %p85
      %s88 = sadd.s32 %s87, 1
      %p91 = scmp.eq.s32.totalorder %s27, 1
      %p92 = scmp.ne.s32.totalorder %s87, %s89
      %p93 = scmp.eq.s32.totalorder %s27, 0
      %p94 = por %p92, %p93
      %p95 = scmp.ne.s32.totalorder %s87, %s89
      %p96 = scmp.eq.s32.totalorder %s32, 1
      %p97 = por %p95, %p96
      %p98 = scmp.ne.s32.totalorder %s89, %s90
      %p99 = scmp.eq.s32.totalorder %s32, 0
      %p100 = por %p98, %p99
      %p101 = scmp.ne.s32.totalorder %s89, %s90
      %p102 = scmp.eq.s32.totalorder %s33, 1
      %p103 = por %p101, %p102
      %p105 = scmp.ne.s32.totalorder %s90, %s104
      %p106 = scmp.eq.s32.totalorder %s33, 0
      %p107 = por %p105, %p106
      %s109 = sadd.s32 %s108, 1
      %p112 = scmp.eq.s32.totalorder %s27, 1
      %p113 = scmp.ne.s32.totalorder %s108, %s110
      %p114 = scmp.eq.s32.totalorder %s27, 0
      %p115 = por %p113, %p114
      %p116 = scmp.ne.s32.totalorder %s108, %s110
      %p117 = scmp.eq.s32.totalorder %s32, 1
      %p118 = por %p116, %p117
      %p119 = scmp.ne.s32.totalorder %s110, %s111
      %p120 = scmp.eq.s32.totalorder %s32, 0
      %p121 = por %p119, %p120
      %p122 = scmp.ne.s32.totalorder %s110, %s111
      %p123 = scmp.eq.s32.totalorder %s33, 1
      %p124 = por %p122, %p123
      %p126 = scmp.ne.s32.totalorder %s111, %s125
      %p127 = scmp.eq.s32.totalorder %s33, 0
      %p128 = por %p126, %p127
      %s130 = sadd.s32 %s129, 1
      %p133 = scmp.eq.s32.totalorder %s27, 1
      %p134 = scmp.ne.s32.totalorder %s129, %s131
      %p135 = scmp.eq.s32.totalorder %s27, 0
      %p136 = por %p134, %p135
      %p137 = scmp.ne.s32.totalorder %s129, %s131
      %p138 = scmp.eq.s32.totalorder %s32, 1
      %p139 = por %p137, %p138
      %p140 = scmp.ne.s32.totalorder %s131, %s132
      %p141 = scmp.eq.s32.totalorder %s32, 0
      %p142 = por %p140, %p141
      %p143 = scmp.ne.s32.totalorder %s131, %s132
      %p144 = scmp.eq.s32.totalorder %s33, 1
      %p145 = por %p143, %p144
      %p147 = scmp.ne.s32.totalorder %s132, %s146
      %p148 = scmp.eq.s32.totalorder %s33, 0
      %p149 = por %p147, %p148
      %s151 = sadd.s32 %s150, 1
      %p154 = scmp.eq.s32.totalorder %s27, 1
      %p155 = scmp.ne.s32.totalorder %s150, %s152
      %p156 = scmp.eq.s32.totalorder %s27, 0
      %p157 = por %p155, %p156
      %p158 = scmp.ne.s32.totalorder %s150, %s152
      %p159 = scmp.eq.s32.totalorder %s32, 1
      %p160 = por %p158, %p159
      %p161 = scmp.ne.s32.totalorder %s152, %s153
      %p162 = scmp.eq.s32.totalorder %s32, 0
      %p163 = por %p161, %p162
      %p164 = scmp.ne.s32.totalorder %s152, %s153
      %p165 = scmp.eq.s32.totalorder %s33, 1
      %p166 = por %p164, %p165
      %p168 = scmp.ne.s32.totalorder %s153, %s167
      %p169 = scmp.eq.s32.totalorder %s33, 0
      %p170 = por %p168, %p169
      %s172 = sadd.s32 %s171, 1
      %p175 = scmp.eq.s32.totalorder %s27, 1
      %p176 = scmp.ne.s32.totalorder %s171, %s173
      %p177 = scmp.eq.s32.totalorder %s27, 0
      %p178 = por %p176, %p177
      %p179 = scmp.ne.s32.totalorder %s171, %s173
      %p180 = scmp.eq.s32.totalorder %s32, 1
      %p181 = por %p179, %p180
      %p182 = scmp.ne.s32.totalorder %s173, %s174
      %p183 = scmp.eq.s32.totalorder %s32, 0
      %p184 = por %p182, %p183
      %p185 = scmp.ne.s32.totalorder %s173, %s174
      %p186 = scmp.eq.s32.totalorder %s33, 1
      %p187 = por %p185, %p186
      %p189 = scmp.ne.s32.totalorder %s174, %s188
      %p190 = scmp.eq.s32.totalorder %s33, 0
      %p191 = por %p189, %p190
      %s193 = sadd.s32 %s192, 1
      %p196 = scmp.eq.s32.totalorder %s27, 1
      %p197 = scmp.ne.s32.totalorder %s192, %s194
      %p198 = scmp.eq.s32.totalorder %s27, 0
      %p199 = por %p197, %p198
      %p200 = scmp.ne.s32.totalorder %s192, %s194
      %p201 = scmp.eq.s32.totalorder %s32, 1
      %p202 = por %p200, %p201
      %p203 = scmp.ne.s32.totalorder %s194, %s195
      %p204 = scmp.eq.s32.totalorder %s32, 0
      %p205 = por %p203, %p204
      %p206 = scmp.ne.s32.totalorder %s194, %s195
      %p207 = scmp.eq.s32.totalorder %s33, 1
      %p208 = por %p206, %p207
      %p210 = scmp.ne.s32.totalorder %s195, %s209
      %p211 = scmp.eq.s32.totalorder %s33, 0
      %p212 = por %p210, %p211
      %s214 = sadd.s32 %s213, 1
      %p217 = scmp.eq.s32.totalorder %s27, 1
      %p218 = scmp.ne.s32.totalorder %s213, %s215
      %p219 = scmp.eq.s32.totalorder %s27, 0
      %p220 = por %p218, %p219
      %p221 = scmp.ne.s32.totalorder %s213, %s215
      %p222 = scmp.eq.s32.totalorder %s32, 1
      %p223 = por %p221, %p222
      %p224 = scmp.ne.s32.totalorder %s215, %s216
      %p225 = scmp.eq.s32.totalorder %s32, 0
      %p226 = por %p224, %p225
      %p227 = scmp.ne.s32.totalorder %s215, %s216
      %p228 = scmp.eq.s32.totalorder %s33, 1
      %p229 = por %p227, %p228
      %p231 = scmp.ne.s32.totalorder %s216, %s230
      %p232 = scmp.eq.s32.totalorder %s33, 0
      %p233 = por %p231, %p232
      %s235 = sadd.s32 %s234, 1
      %p238 = scmp.eq.s32.totalorder %s27, 1
      %p239 = scmp.ne.s32.totalorder %s234, %s236
      %p240 = scmp.eq.s32.totalorder %s27, 0
      %p241 = por %p239, %p240
      %p242 = scmp.ne.s32.totalorder %s234, %s236
      %p243 = scmp.eq.s32.totalorder %s32, 1
      %p244 = por %p242, %p243
      %p245 = scmp.ne.s32.totalorder %s236, %s237
      %p246 = scmp.eq.s32.totalorder %s32, 0
      %p247 = por %p245, %p246
      %p248 = scmp.ne.s32.totalorder %s236, %s237
      %p249 = scmp.eq.s32.totalorder %s33, 1
      %p250 = por %p248, %p249
      %p252 = scmp.ne.s32.totalorder %s237, %s251
      %p253 = scmp.eq.s32.totalorder %s33, 0
      %p254 = por %p252, %p253
      %s256 = sadd.s32 %s255, 1
      %p259 = scmp.eq.s32.totalorder %s27, 1
      %p260 = scmp.ne.s32.totalorder %s255, %s257
      %p261 = scmp.eq.s32.totalorder %s27, 0
      %p262 = por %p260, %p261
      %p263 = scmp.ne.s32.totalorder %s255, %s257
      %p264 = scmp.eq.s32.totalorder %s32, 1
      %p265 = por %p263, %p264
      %p266 = scmp.ne.s32.totalorder %s257, %s258
      %p267 = scmp.eq.s32.totalorder %s32, 0
      %p268 = por %p266, %p267
      %p269 = scmp.ne.s32.totalorder %s257, %s258
      %p270 = scmp.eq.s32.totalorder %s33, 1
      %p271 = por %p269, %p270
      %p273 = scmp.ne.s32.totalorder %s258, %s272
      %p274 = scmp.eq.s32.totalorder %s33, 0
      %p275 = por %p273, %p274
      %s277 = sadd.s32 %s276, 1
      %p280 = scmp.eq.s32.totalorder %s27, 1
      %p281 = scmp.ne.s32.totalorder %s276, %s278
      %p282 = scmp.eq.s32.totalorder %s27, 0
      %p283 = por %p281, %p282
      %p284 = scmp.ne.s32.totalorder %s276, %s278
      %p285 = scmp.eq.s32.totalorder %s32, 1
      %p286 = por %p284, %p285
      %p287 = scmp.ne.s32.totalorder %s278, %s279
      %p288 = scmp.eq.s32.totalorder %s32, 0
      %p289 = por %p287, %p288
      %p290 = scmp.ne.s32.totalorder %s278, %s279
      %p291 = scmp.eq.s32.totalorder %s33, 1
      %p292 = por %p290, %p291
      %p294 = scmp.ne.s32.totalorder %s279, %s293
      %p295 = scmp.eq.s32.totalorder %s33, 0
      %p296 = por %p294, %p295
      %s298 = sadd.s32 %s297, 1
      %p301 = scmp.eq.s32.totalorder %s27, 1
      %p302 = scmp.ne.s32.totalorder %s297, %s299
      %p303 = scmp.eq.s32.totalorder %s27, 0
      %p304 = por %p302, %p303
      %p305 = scmp.ne.s32.totalorder %s297, %s299
      %p306 = scmp.eq.s32.totalorder %s32, 1
      %p307 = por %p305, %p306
      %p308 = scmp.ne.s32.totalorder %s299, %s300
      %p309 = scmp.eq.s32.totalorder %s32, 0
      %p310 = por %p308, %p309
      %p311 = scmp.ne.s32.totalorder %s299, %s300
      %p312 = scmp.eq.s32.totalorder %s33, 1
      %p313 = por %p311, %p312
      %p315 = scmp.ne.s32.totalorder %s300, %s314
      %p316 = scmp.eq.s32.totalorder %s33, 0
      %p317 = por %p315, %p316
      %s319 = sadd.s32 %s318, 1
      %p322 = scmp.eq.s32.totalorder %s27, 1
      %p323 = scmp.ne.s32.totalorder %s318, %s320
      %p324 = scmp.eq.s32.totalorder %s27, 0
      %p325 = por %p323, %p324
      %p326 = scmp.ne.s32.totalorder %s318, %s320
      %p327 = scmp.eq.s32.totalorder %s32, 1
      %p328 = por %p326, %p327
      %p329 = scmp.ne.s32.totalorder %s320, %s321
      %p330 = scmp.eq.s32.totalorder %s32, 0
      %p331 = por %p329, %p330
      %p332 = scmp.ne.s32.totalorder %s320, %s321
      %p333 = scmp.eq.s32.totalorder %s33, 1
      %p334 = por %p332, %p333
      %p336 = scmp.ne.s32.totalorder %s321, %s335
      %p337 = scmp.eq.s32.totalorder %s33, 0
      %p338 = por %p336, %p337
      %s340 = sadd.s32 %s339, 1
      %p343 = scmp.eq.s32.totalorder %s27, 1
      %p344 = scmp.ne.s32.totalorder %s339, %s341
      %p345 = scmp.eq.s32.totalorder %s27, 0
      %p346 = por %p344, %p345
      %p347 = scmp.ne.s32.totalorder %s339, %s341
      %p348 = scmp.eq.s32.totalorder %s32, 1
      %p349 = por %p347, %p348
      %p350 = scmp.ne.s32.totalorder %s341, %s342
      %p351 = scmp.eq.s32.totalorder %s32, 0
      %p352 = por %p350, %p351
      %p353 = scmp.ne.s32.totalorder %s341, %s342
      %p354 = scmp.eq.s32.totalorder %s33, 1
      %p355 = por %p353, %p354
      %p357 = scmp.ne.s32.totalorder %s342, %s356
      %p358 = scmp.eq.s32.totalorder %s33, 0
      %p359 = por %p357, %p358
      %s361 = sadd.s32 %s360, 1
      %p364 = scmp.eq.s32.totalorder %s27, 1
      %p365 = scmp.ne.s32.totalorder %s360, %s362
      %p366 = scmp.eq.s32.totalorder %s27, 0
      %p367 = por %p365, %p366
      %p368 = scmp.ne.s32.totalorder %s360, %s362
      %p369 = scmp.eq.s32.totalorder %s32, 1
      %p370 = por %p368, %p369
      %p371 = scmp.ne.s32.totalorder %s362, %s363
      %p372 = scmp.eq.s32.totalorder %s32, 0
      %p373 = por %p371, %p372
      %p374 = scmp.ne.s32.totalorder %s362, %s363
      %p375 = scmp.eq.s32.totalorder %s33, 1
      %p376 = por %p374, %p375
      %p378 = scmp.ne.s32.totalorder %s363, %s377
      %p379 = scmp.eq.s32.totalorder %s33, 0
      %p380 = por %p378, %p379
      %s382 = sadd.s32 %s381, 1
      %p385 = scmp.eq.s32.totalorder %s27, 1
      %p386 = scmp.ne.s32.totalorder %s381, %s383
      %p387 = scmp.eq.s32.totalorder %s27, 0
      %p388 = por %p386, %p387
      %p389 = scmp.ne.s32.totalorder %s381, %s383
      %p390 = scmp.eq.s32.totalorder %s32, 1
      %p391 = por %p389, %p390
      %p392 = scmp.ne.s32.totalorder %s383, %s384
      %p393 = scmp.eq.s32.totalorder %s32, 0
      %p394 = por %p392, %p393
      %p395 = scmp.ne.s32.totalorder %s383, %s384
      %p396 = scmp.eq.s32.totalorder %s33, 1
      %p397 = por %p395, %p396
      %p399 = scmp.ne.s32.totalorder %s384, %s398
      %p400 = scmp.eq.s32.totalorder %s33, 0
      %p401 = por %p399, %p400
      %s403 = sadd.s32 %s402, 1
      %p406 = scmp.eq.s32.totalorder %s27, 1
      %p407 = scmp.ne.s32.totalorder %s402, %s404
      %p408 = scmp.eq.s32.totalorder %s27, 0
      %p409 = por %p407, %p408
      %p410 = scmp.ne.s32.totalorder %s402, %s404
      %p411 = scmp.eq.s32.totalorder %s32, 1
      %p412 = por %p410, %p411
      %p413 = scmp.ne.s32.totalorder %s404, %s405
      %p414 = scmp.eq.s32.totalorder %s32, 0
      %p415 = por %p413, %p414
      %p416 = scmp.ne.s32.totalorder %s404, %s405
      %p417 = scmp.eq.s32.totalorder %s33, 1
      %p418 = por %p416, %p417
      %p420 = scmp.ne.s32.totalorder %s405, %s419
      %p421 = scmp.eq.s32.totalorder %s33, 0
      %p422 = por %p420, %p421
      %s423 = ssub.s32 %s27, %s34
      %p424 = scmp.eq.s32.totalorder %s423, 0
      %s426 = sadd.s32 %s425, 1
      %s427 = scalar_select %p424, %s425, %s426
      %p430 = pneg %p424
      %p431 = scmp.eq.s32.totalorder %s27, 1
      %p432 = por %p430, %p431
      %p433 = scmp.ne.s32.totalorder %s425, %s428
      %p434 = scmp.eq.s32.totalorder %s27, 0
      %p435 = por %p433, %p434
      %p436 = scmp.ne.s32.totalorder %s425, %s428
      %p437 = scmp.eq.s32.totalorder %s32, 1
      %p438 = por %p436, %p437
      %p439 = scmp.ne.s32.totalorder %s428, %s429
      %p440 = scmp.eq.s32.totalorder %s32, 0
      %p441 = por %p439, %p440
      %p442 = scmp.ne.s32.totalorder %s428, %s429
      %p443 = scmp.eq.s32.totalorder %s33, 1
      %p444 = por %p442, %p443
      %p446 = scmp.ne.s32.totalorder %s429, %s445
      %p447 = scmp.eq.s32.totalorder %s33, 0
      %p448 = por %p446, %p447
      %p449 = scmp.le.s32.totalorder 1, %s27
      %p450 = scmp.lt.s32.totalorder %s27, 3
      %p451 = pnand %p449, %p450
      %p452 = pneg %p451
      // Predicated region
      $region9: #{simcse_forward.1} parent=5 // pred_check
        _
      $region10: #{simcse_forward.1} parent=5 // pred_check_branch
        %454 = sbr.rel (%p451) target = $region12
      $region11: #{simcse_forward.1} parent=5 // pred_region
        %s455 = ssub.s32 %s27, 1
        // Predicated region
        $region13: #{simcse_forward.1} parent=11 // pred_check
          %p456 = pneg %p100
        $region14: #{simcse_forward.1} parent=11 // pred_check_branch
          %458 = sbr.rel (%p456) target = $region16
        $region15: #{simcse_forward.1} parent=11 // pred_region
          _
        $region16: #{simcse_forward.1} parent=11 // pred_fallthru
          _
        // Predicated region
        $region17: #{simcse_forward.1} parent=11 // pred_check
          %p459 = pneg %p121
        $region18: #{simcse_forward.1} parent=11 // pred_check_branch
          %461 = sbr.rel (%p459) target = $region20
        $region19: #{simcse_forward.1} parent=11 // pred_region
          _
        $region20: #{simcse_forward.1} parent=11 // pred_fallthru
          _
        // Predicated region
        $region21: #{simcse_forward.1} parent=11 // pred_check
          %p462 = pneg %p142
        $region22: #{simcse_forward.1} parent=11 // pred_check_branch
          %464 = sbr.rel (%p462) target = $region24
        $region23: #{simcse_forward.1} parent=11 // pred_region
          _
        $region24: #{simcse_forward.1} parent=11 // pred_fallthru
          _
        // Predicated region
        $region25: #{simcse_forward.1} parent=11 // pred_check
          %p465 = pneg %p163
        $region26: #{simcse_forward.1} parent=11 // pred_check_branch
          %467 = sbr.rel (%p465) target = $region28
        $region27: #{simcse_forward.1} parent=11 // pred_region
          _
        $region28: #{simcse_forward.1} parent=11 // pred_fallthru
          _
        // Predicated region
        $region29: #{simcse_forward.1} parent=11 // pred_check
          %p468 = pneg %p184
        $region30: #{simcse_forward.1} parent=11 // pred_check_branch
          %470 = sbr.rel (%p468) target = $region32
        $region31: #{simcse_forward.1} parent=11 // pred_region
          _
        $region32: #{simcse_forward.1} parent=11 // pred_fallthru
          _
        // Predicated region
        $region33: #{simcse_forward.1} parent=11 // pred_check
          %p471 = pneg %p205
        $region34: #{simcse_forward.1} parent=11 // pred_check_branch
          %473 = sbr.rel (%p471) target = $region36
        $region35: #{simcse_forward.1} parent=11 // pred_region
          _
        $region36: #{simcse_forward.1} parent=11 // pred_fallthru
          _
        // Predicated region
        $region37: #{simcse_forward.1} parent=11 // pred_check
          %p474 = pneg %p226
        $region38: #{simcse_forward.1} parent=11 // pred_check_branch
          %476 = sbr.rel (%p474) target = $region40
        $region39: #{simcse_forward.1} parent=11 // pred_region
          _
        $region40: #{simcse_forward.1} parent=11 // pred_fallthru
          _
        // Predicated region
        $region41: #{simcse_forward.1} parent=11 // pred_check
          %p477 = pneg %p247
        $region42: #{simcse_forward.1} parent=11 // pred_check_branch
          %479 = sbr.rel (%p477) target = $region44
        $region43: #{simcse_forward.1} parent=11 // pred_region
          _
        $region44: #{simcse_forward.1} parent=11 // pred_fallthru
          _
        // Predicated region
        $region45: #{simcse_forward.1} parent=11 // pred_check
          %p480 = pneg %p268
        $region46: #{simcse_forward.1} parent=11 // pred_check_branch
          %482 = sbr.rel (%p480) target = $region48
        $region47: #{simcse_forward.1} parent=11 // pred_region
          _
        $region48: #{simcse_forward.1} parent=11 // pred_fallthru
          _
        // Predicated region
        $region49: #{simcse_forward.1} parent=11 // pred_check
          %p483 = pneg %p289
        $region50: #{simcse_forward.1} parent=11 // pred_check_branch
          %485 = sbr.rel (%p483) target = $region52
        $region51: #{simcse_forward.1} parent=11 // pred_region
          _
        $region52: #{simcse_forward.1} parent=11 // pred_fallthru
          _
        // Predicated region
        $region53: #{simcse_forward.1} parent=11 // pred_check
          %p486 = pneg %p310
        $region54: #{simcse_forward.1} parent=11 // pred_check_branch
          %488 = sbr.rel (%p486) target = $region56
        $region55: #{simcse_forward.1} parent=11 // pred_region
          _
        $region56: #{simcse_forward.1} parent=11 // pred_fallthru
          _
        // Predicated region
        $region57: #{simcse_forward.1} parent=11 // pred_check
          %p489 = pneg %p331
        $region58: #{simcse_forward.1} parent=11 // pred_check_branch
          %491 = sbr.rel (%p489) target = $region60
        $region59: #{simcse_forward.1} parent=11 // pred_region
          _
        $region60: #{simcse_forward.1} parent=11 // pred_fallthru
          _
        // Predicated region
        $region61: #{simcse_forward.1} parent=11 // pred_check
          %p492 = pneg %p352
        $region62: #{simcse_forward.1} parent=11 // pred_check_branch
          %494 = sbr.rel (%p492) target = $region64
        $region63: #{simcse_forward.1} parent=11 // pred_region
          _
        $region64: #{simcse_forward.1} parent=11 // pred_fallthru
          _
        // Predicated region
        $region65: #{simcse_forward.1} parent=11 // pred_check
          %p495 = pneg %p373
        $region66: #{simcse_forward.1} parent=11 // pred_check_branch
          %497 = sbr.rel (%p495) target = $region68
        $region67: #{simcse_forward.1} parent=11 // pred_region
          _
        $region68: #{simcse_forward.1} parent=11 // pred_fallthru
          _
        // Predicated region
        $region69: #{simcse_forward.1} parent=11 // pred_check
          %p498 = pneg %p394
        $region70: #{simcse_forward.1} parent=11 // pred_check_branch
          %500 = sbr.rel (%p498) target = $region72
        $region71: #{simcse_forward.1} parent=11 // pred_region
          _
        $region72: #{simcse_forward.1} parent=11 // pred_fallthru
          _
        // Predicated region
        $region73: #{simcse_forward.1} parent=11 // pred_check
          %p501 = pneg %p415
        $region74: #{simcse_forward.1} parent=11 // pred_check_branch
          %503 = sbr.rel (%p501) target = $region76
        $region75: #{simcse_forward.1} parent=11 // pred_region
          _
        $region76: #{simcse_forward.1} parent=11 // pred_fallthru
          _
      $region12: #{simcse_forward.1} parent=5 // pred_fallthru
        _
      %p504 = scmp.lt.s32.totalorder %s27, 2
      // Predicated region
      $region77: #{simcse_forward.1} parent=5 // pred_check
        %p505 = pneg %p504
      $region78: #{simcse_forward.1} parent=5 // pred_check_branch
        %507 = sbr.rel (%p505) target = $region80
      $region79: #{simcse_forward.1} parent=5 // pred_region
        // Predicated region
        $region81: #{simcse_forward.1} parent=79 // pred_check
          %p508 = pneg %p47
        $region82: #{simcse_forward.1} parent=79 // pred_check_branch
          %510 = sbr.rel (%p508) target = $region84
        $region83: #{simcse_forward.1} parent=79 // pred_region
          %p511 = scmp.lt.s32.totalorder %s27, 1
          %s512 = scalar_select %p511, %s27, 1
          %s513 = smul.addr %s512, 8
          %s514 = scalar_lea.vmem %s0, %s513
        $region84: #{simcse_forward.1} parent=79 // pred_fallthru
          _
        // Predicated region
        $region85: #{simcse_forward.1} parent=79 // pred_check
          %p515 = pneg %p73
        $region86: #{simcse_forward.1} parent=79 // pred_check_branch
          %517 = sbr.rel (%p515) target = $region88
        $region87: #{simcse_forward.1} parent=79 // pred_region
          %p518 = scmp.lt.s32.totalorder %s27, 1
          %s519 = scalar_select %p518, %s27, 1
          %s520 = scalar_lea.vmem %s1, %s519
        $region88: #{simcse_forward.1} parent=79 // pred_fallthru
          _
      $region80: #{simcse_forward.1} parent=5 // pred_fallthru
        _
      %p521 = scmp.le.s32.totalorder 1, %s27
      %p522 = scmp.lt.s32.totalorder %s27, 3
      %p523 = pnand %p521, %p522
      %p524 = pneg %p523
      // Predicated region
      $region89: #{simcse_forward.1} parent=5 // pred_check
        _
      $region90: #{simcse_forward.1} parent=5 // pred_check_branch
        %526 = sbr.rel (%p523) target = $region92
      $region91: #{simcse_forward.1} parent=5 // pred_region
        %s527 = ssub.s32 %s27, 1
        %p528 = scmp.lt.s32.totalorder %s32, 1
        %s529 = scalar_select %p528, %s32, 1
        %s530 = smul.addr %s529, 8
        %s531 = scalar_lea.vmem %s0, %s530
        %p532 = pneg %p53
        %p533 = pneg %p50
        %p534 = scmp.lt.s32.totalorder %s32, 1
        %s535 = scalar_select %p534, %s32, 1
        %s536 = scalar_lea.vmem %s1, %s535
        %p537 = pneg %p79
        %p538 = pneg %p76
        %p539 = pneg %p100
        %p540 = pneg %p97
        %p541 = pneg %p121
        %p542 = pneg %p118
        %p543 = pneg %p142
        %p544 = pneg %p139
        %p545 = pneg %p163
        %p546 = pneg %p160
        %p547 = pneg %p184
        %p548 = pneg %p181
        %p549 = pneg %p205
        %p550 = pneg %p202
        %p551 = pneg %p226
        %p552 = pneg %p223
        %p553 = pneg %p247
        %p554 = pneg %p244
        %p555 = pneg %p268
        %p556 = pneg %p265
        %p557 = pneg %p289
        %p558 = pneg %p286
        %p559 = pneg %p310
        %p560 = pneg %p307
        %p561 = pneg %p331
        %p562 = pneg %p328
        %p563 = pneg %p352
        %p564 = pneg %p349
        %p565 = pneg %p373
        %p566 = pneg %p370
        %p567 = pneg %p394
        %p568 = pneg %p391
        %p569 = pneg %p415
        %p570 = pneg %p412
        %p571 = pneg %p441
        %p572 = pneg %p438
        %s573 = sand.u32 %s428, 1
        %s574 = scalar_lea.sflag [#allocation3], %s573
        %s575 = sand.u32 %s428, 1
        %s576 = scalar_lea.vmem [#allocation2], %s575
        %p577 = scmp.lt.s32.totalorder %s32, 1
        %s578 = scalar_select %p577, %s32, 1
        %s579 = smul.addr %s578, 8
        %s580 = scalar_lea.vmem %s0, %s579
        %p581 = scmp.lt.s32.totalorder %s32, 1
        %s582 = scalar_select %p581, %s32, 1
        %s583 = scalar_lea.vmem %s1, %s582
        %v584 = vld [vmem:[%s580] sm:$0xff]
        %v585 = vld [vmem:[%s583] sm:$0x1]
        %v586 = vld [vmem:[%s2] sm:$0x1]
        %v587 = vld [vmem:[%s3] sm:$0x1]
        %vm588 = vcmask 261120
        %v589 = vsel %vm588, %v584, 0.0
        %590 = vadd.xlane.f32.xlu0 %v589
        %v591 = vpop.xlane.xlu0 %590
        %v592 = vrcp.pop 32.0
        %v593 = vmul.f32 %v591, %v592
        %v594 = vsub.f32 %v584, %v593
        %v595 = vmul.f32 %v594, %v594
        %v596 = vsel %vm588, %v595, 0.0
        %597 = vadd.xlane.f32.xlu0 %v596
        %v598 = vpop.xlane.xlu0 %597
        %v599 = vmul.f32 %v598, %v592
        %v600 = vadd.f32 %v599, 1e-12
        %v601 = vrsqrt.pop %v600
        %v602 = vmul.f32 %v594, %v601
        %v604 = vlaneseq
        %v605 = vshrl.u32 %v604, 7
        %v606 = vsub.s32 0, %v605
        %v607 = vrot.slane %v586, %v606
        %v609 = vmul.f32 %v602, %v607
        %v611 = vlaneseq
        %v612 = vshrl.u32 %v611, 7
        %v613 = vsub.s32 0, %v612
        %v614 = vrot.slane %v587, %v613
        %v616 = vadd.f32 %v609, %v614
        %v617 = vld [vmem:[%s4] sm:$0xff]
        %v618 = vld [vmem:[%s4 + $0x8] sm:$0xff]
        %v619 = vld [vmem:[%s4 + $0x10] sm:$0xff]
        %v620 = vld [vmem:[%s4 + $0x18] sm:$0xff]
        %v621 = vld [vmem:[%s5] sm:$0x1]
        %v623 = vlaneseq
        %v624 = vshrl.u32 %v623, 7
        %v625 = vsub.s32 0, %v624
        %v626 = vrot.slane %v621, %v625
        %v629 = vsel %vm588, %v616, 0
        %631 = vmatprep.subr.mxu0 0.0
        %632 = vmatpush1.msra.mxu0 %v617
        %633 = vmatprep.subr.mxu0 0.0
        %634 = vmatpush1.msra.mxu0 %v618
        %635 = vmatprep.subr.mxu0 0.0
        %636 = vmatpush1.msra.mxu0 %v619
        %637 = vmatprep.subr.mxu0 0.0
        %638 = vmatpush1.msra.mxu0 %v620
        %639 = vmatprep.subr.mxu0 0.0
        %640 = vmatpush1.msra.mxu0 0.0
        %641 = vmatprep.subr.mxu0 0.0
        %642 = vmatpush1.msra.mxu0 0.0
        %643 = vmatprep.subr.mxu0 0.0
        %644 = vmatpush1.msra.mxu0 0.0
        %645 = vmatprep.subr.mxu0 0.0
        %646 = vmatpush1.msra.mxu0 0.0
        %647 = vmatprep.subr.mxu0 0.0
        %648 = vmatpush1.msra.mxu0 0.0
        %649 = vmatprep.subr.mxu0 0.0
        %650 = vmatpush1.msra.mxu0 0.0
        %651 = vmatprep.subr.mxu0 0.0
        %652 = vmatpush1.msra.mxu0 0.0
        %653 = vmatprep.subr.mxu0 0.0
        %654 = vmatpush1.msra.mxu0 0.0
        %655 = vmatprep.subr.mxu0 0.0
        %656 = vmatpush1.msra.mxu0 0.0
        %657 = vmatprep.subr.mxu0 0.0
        %658 = vmatpush1.msra.mxu0 0.0
        %659 = vmatprep.subr.mxu0 0.0
        %660 = vmatpush1.msra.mxu0 0.0
        %661 = vmatprep.subr.mxu0 0.0
        %662 = vmatpush1.msra.mxu0 0.0
        %663 = vmatprep.subr.mxu0 0.0
        %664 = vmatpush1.msra.mxu0 0.0
        %665 = vmatprep.subr.mxu0 0.0
        %666 = vmatpush1.msra.mxu0 0.0
        %667 = vmatprep.subr.mxu0 0.0
        %668 = vmatpush1.msra.mxu0 0.0
        %669 = vmatprep.subr.mxu0 0.0
        %670 = vmatpush1.msra.mxu0 0.0
        %671 = vmatprep.subr.mxu0 0.0
        %672 = vmatpush1.msra.mxu0 0.0
        %673 = vmatprep.subr.mxu0 0.0
        %674 = vmatpush1.msra.mxu0 0.0
        %675 = vmatprep.subr.mxu0 0.0
        %676 = vmatpush1.msra.mxu0 0.0
        %677 = vmatprep.subr.mxu0 0.0
        %678 = vmatpush1.msra.mxu0 0.0
        %679 = vmatprep.subr.mxu0 0.0
        %680 = vmatpush1.msra.mxu0 0.0
        %681 = vmatprep.subr.mxu0 0.0
        %682 = vmatpush1.msra.mxu0 0.0
        %683 = vmatprep.subr.mxu0 0.0
        %684 = vmatpush1.msra.mxu0 0.0
        %685 = vmatprep.subr.mxu0 0.0
        %686 = vmatpush1.msra.mxu0 0.0
        %687 = vmatprep.subr.mxu0 0.0
        %688 = vmatpush1.msra.mxu0 0.0
        %689 = vmatprep.subr.mxu0 0.0
        %690 = vmatpush1.msra.mxu0 0.0
        %691 = vmatprep.subr.mxu0 0.0
        %692 = vmatpush1.msra.mxu0 0.0
        %693 = vmatprep.subr.mxu0 0.0
        %694 = vmatpush1.msra.mxu0 0.0
        %695 = vmatprep.mubr.f32.mxu0 0.0
        %696 = vmatmul.mubr.f32.gmra.mrb[0].mxu0 %v629
        %v697 = vpop.f32.mrb[0].mxu0
        %v698 = vadd.f32 %v626, %v697
        %v699 = vpop.f32.mrb[0].mxu0
        %700 = vdwg.mxu0
        %v701 = vld [vmem:[%s6] sm:$0xff]
        %v702 = vld [vmem:[%s6 + $0x8] sm:$0xff]
        %v703 = vld [vmem:[%s6 + $0x10] sm:$0xff]
        %v704 = vld [vmem:[%s6 + $0x18] sm:$0xff]
        %v705 = vld [vmem:[%s7] sm:$0x1]
        %707 = vrot.lane.b32.xlu0 %v698, 96
        %v708 = vpop.permute.xlu0 %707
        %vm709 = vcmask 130048
        %v710 = vsel %vm709, %v698, 0
        %v712 = vsel %vm709, %v708, 0
        %714 = vmatprep.subr.mxu0 0.0
        %715 = vmatpush1.xpose.msra.mxu0 %v712
        %716 = vmatprep.subr.mxu0 0.0
        %717 = vmatpush1.xpose.msra.mxu0 0.0
        %718 = vmatprep.subr.mxu0 0.0
        %719 = vmatpush1.xpose.msra.mxu0 0.0
        %720 = vmatprep.subr.mxu0 0.0
        %721 = vmatpush1.xpose.msra.mxu0 0.0
        %722 = vmatprep.subr.mxu0 0.0
        %723 = vmatpush1.xpose.msra.mxu0 0.0
        %724 = vmatprep.subr.mxu0 0.0
        %725 = vmatpush1.xpose.msra.mxu0 0.0
        %726 = vmatprep.subr.mxu0 0.0
        %727 = vmatpush1.xpose.msra.mxu0 0.0
        %728 = vmatprep.subr.mxu0 0.0
        %729 = vmatpush1.xpose.msra.mxu0 0.0
        %730 = vmatprep.subr.mxu0 0.0
        %731 = vmatpush1.xpose.msra.mxu0 0.0
        %732 = vmatprep.subr.mxu0 0.0
        %733 = vmatpush1.xpose.msra.mxu0 0.0
        %734 = vmatprep.subr.mxu0 0.0
        %735 = vmatpush1.xpose.msra.mxu0 0.0
        %736 = vmatprep.subr.mxu0 0.0
        %737 = vmatpush1.xpose.msra.mxu0 0.0
        %738 = vmatprep.subr.mxu0 0.0
        %739 = vmatpush1.xpose.msra.mxu0 0.0
        %740 = vmatprep.subr.mxu0 0.0
        %741 = vmatpush1.xpose.msra.mxu0 0.0
        %742 = vmatprep.subr.mxu0 0.0
        %743 = vmatpush1.xpose.msra.mxu0 0.0
        %744 = vmatprep.subr.mxu0 0.0
        %745 = vmatpush1.xpose.msra.mxu0 0.0
        %746 = vmatprep.subr.mxu0 0.0
        %747 = vmatpush1.xpose.msra.mxu0 0.0
        %748 = vmatprep.subr.mxu0 0.0
        %749 = vmatpush1.xpose.msra.mxu0 0.0
        %750 = vmatprep.subr.mxu0 0.0
        %751 = vmatpush1.xpose.msra.mxu0 0.0
        %752 = vmatprep.subr.mxu0 0.0
        %753 = vmatpush1.xpose.msra.mxu0 0.0
        %754 = vmatprep.subr.mxu0 0.0
        %755 = vmatpush1.xpose.msra.mxu0 0.0
        %756 = vmatprep.subr.mxu0 0.0
        %757 = vmatpush1.xpose.msra.mxu0 0.0
        %758 = vmatprep.subr.mxu0 0.0
        %759 = vmatpush1.xpose.msra.mxu0 0.0
        %760 = vmatprep.subr.mxu0 0.0
        %761 = vmatpush1.xpose.msra.mxu0 0.0
        %762 = vmatprep.subr.mxu0 0.0
        %763 = vmatpush1.xpose.msra.mxu0 0.0
        %764 = vmatprep.subr.mxu0 0.0
        %765 = vmatpush1.xpose.msra.mxu0 0.0
        %766 = vmatprep.subr.mxu0 0.0
        %767 = vmatpush1.xpose.msra.mxu0 0.0
        %768 = vmatprep.subr.mxu0 0.0
        %769 = vmatpush1.xpose.msra.mxu0 0.0
        %770 = vmatprep.subr.mxu0 0.0
        %771 = vmatpush1.xpose.msra.mxu0 0.0
        %772 = vmatprep.subr.mxu0 0.0
        %773 = vmatpush1.xpose.msra.mxu0 0.0
        %774 = vmatprep.subr.mxu0 0.0
        %775 = vmatpush1.xpose.msra.mxu0 0.0
        %776 = vmatprep.subr.mxu0 0.0
        %777 = vmatpush1.xpose.msra.mxu0 0.0
        %778 = vmatprep.mubr.f32.mxu0 0.0
        %779 = vmatmul.mubr.f32.gmra.mrb[0].mxu0 %v710
        %v780 = vpop.f32.mrb[0].mxu0
        %v781 = vadd.f32 0.0, %v780
        %v782 = vpop.f32.mrb[0].mxu0
        %783 = vdwg.mxu0
        %v784 = vmul.f32 %v781, 0.25
        %v786 = vlaneseq
        %v787 = vshrl.u32 %v786, 7
        %v788 = vsub.s32 0, %v787
        %v789 = vrot.slane %v585, %v788
        %v791 = vadd.f32 %v784, %v789
        %vm792 = vcmask 64512
        %v793 = vsel %vm792, %v791, -inf
        %794 = vmax.xlane.f32.xlu0 %v793
        %v795 = vpop.xlane.xlu0 %794
        %v796 = vsub.f32 %v791, %v795
        %v797 = vmul.f32 %v796, 1.442695
        %v798 = vpow.pop %v797
        %v799 = vsel %vm792, %v798, 0.0
        %800 = vadd.xlane.f32.xlu0 %v799
        %v801 = vpop.xlane.xlu0 %800
        %v802 = vrcp.pop %v801
        %v803 = vmul.f32 %v798, %v802
        %804 = vrot.lane.b32.xlu0 %v698, 64
        %v805 = vpop.permute.xlu0 %804
        %v808 = vsel %vm792, %v803, 0
        %810 = vmatprep.subr.mxu0 0.0
        %811 = vmatpush1.msra.mxu0 %v805
        %812 = vmatprep.subr.mxu0 0.0
        %813 = vmatpush1.msra.mxu0 0.0
        %814 = vmatprep.subr.mxu0 0.0
        %815 = vmatpush1.msra.mxu0 0.0
        %816 = vmatprep.subr.mxu0 0.0
        %817 = vmatpush1.msra.mxu0 0.0
        %818 = vmatprep.subr.mxu0 0.0
        %819 = vmatpush1.msra.mxu0 0.0
        %820 = vmatprep.subr.mxu0 0.0
        %821 = vmatpush1.msra.mxu0 0.0
        %822 = vmatprep.subr.mxu0 0.0
        %823 = vmatpush1.msra.mxu0 0.0
        %824 = vmatprep.subr.mxu0 0.0
        %825 = vmatpush1.msra.mxu0 0.0
        %826 = vmatprep.subr.mxu0 0.0
        %827 = vmatpush1.msra.mxu0 0.0
        %828 = vmatprep.subr.mxu0 0.0
        %829 = vmatpush1.msra.mxu0 0.0
        %830 = vmatprep.subr.mxu0 0.0
        %831 = vmatpush1.msra.mxu0 0.0
        %832 = vmatprep.subr.mxu0 0.0
        %833 = vmatpush1.msra.mxu0 0.0
        %834 = vmatprep.subr.mxu0 0.0
        %835 = vmatpush1.msra.mxu0 0.0
        %836 = vmatprep.subr.mxu0 0.0
        %837 = vmatpush1.msra.mxu0 0.0
        %838 = vmatprep.subr.mxu0 0.0
        %839 = vmatpush1.msra.mxu0 0.0
        %840 = vmatprep.subr.mxu0 0.0
        %841 = vmatpush1.msra.mxu0 0.0
        %842 = vmatprep.subr.mxu0 0.0
        %843 = vmatpush1.msra.mxu0 0.0
        %844 = vmatprep.subr.mxu0 0.0
        %845 = vmatpush1.msra.mxu0 0.0
        %846 = vmatprep.subr.mxu0 0.0
        %847 = vmatpush1.msra.mxu0 0.0
        %848 = vmatprep.subr.mxu0 0.0
        %849 = vmatpush1.msra.mxu0 0.0
        %850 = vmatprep.subr.mxu0 0.0
        %851 = vmatpush1.msra.mxu0 0.0
        %852 = vmatprep.subr.mxu0 0.0
        %853 = vmatpush1.msra.mxu0 0.0
        %854 = vmatprep.subr.mxu0 0.0
        %855 = vmatpush1.msra.mxu0 0.0
        %856 = vmatprep.subr.mxu0 0.0
        %857 = vmatpush1.msra.mxu0 0.0
        %858 = vmatprep.subr.mxu0 0.0
        %859 = vmatpush1.msra.mxu0 0.0
        %860 = vmatprep.subr.mxu0 0.0
        %861 = vmatpush1.msra.mxu0 0.0
        %862 = vmatprep.subr.mxu0 0.0
        %863 = vmatpush1.msra.mxu0 0.0
        %864 = vmatprep.subr.mxu0 0.0
        %865 = vmatpush1.msra.mxu0 0.0
        %866 = vmatprep.subr.mxu0 0.0
        %867 = vmatpush1.msra.mxu0 0.0
        %868 = vmatprep.subr.mxu0 0.0
        %869 = vmatpush1.msra.mxu0 0.0
        %870 = vmatprep.subr.mxu0 0.0
        %871 = vmatpush1.msra.mxu0 0.0
        %872 = vmatprep.subr.mxu0 0.0
        %873 = vmatpush1.msra.mxu0 0.0
        %874 = vmatprep.mubr.f32.mxu0 0.0
        %875 = vmatmul.mubr.f32.gmra.mrb[0].mxu0 %v808
        %v876 = vpop.f32.mrb[0].mxu0
        %v877 = vadd.f32 0.0, %v876
        %v878 = vpop.f32.mrb[0].mxu0
        %879 = vdwg.mxu0
        %v881 = vsel %vm709, %v877, 0
        %883 = vmatprep.subr.mxu0 0.0
        %884 = vmatpush1.msra.mxu0 %v701
        %885 = vmatprep.subr.mxu0 0.0
        %886 = vmatpush1.msra.mxu0 %v702
        %887 = vmatprep.subr.mxu0 0.0
        %888 = vmatpush1.msra.mxu0 0.0
        %889 = vmatprep.subr.mxu0 0.0
        %890 = vmatpush1.msra.mxu0 0.0
        %891 = vmatprep.subr.mxu0 0.0
        %892 = vmatpush1.msra.mxu0 0.0
        %893 = vmatprep.subr.mxu0 0.0
        %894 = vmatpush1.msra.mxu0 0.0
        %895 = vmatprep.subr.mxu0 0.0
        %896 = vmatpush1.msra.mxu0 0.0
        %897 = vmatprep.subr.mxu0 0.0
        %898 = vmatpush1.msra.mxu0 0.0
        %899 = vmatprep.subr.mxu0 0.0
        %900 = vmatpush1.msra.mxu0 0.0
        %901 = vmatprep.subr.mxu0 0.0
        %902 = vmatpush1.msra.mxu0 0.0
        %903 = vmatprep.subr.mxu0 0.0
        %904 = vmatpush1.msra.mxu0 0.0
        %905 = vmatprep.subr.mxu0 0.0
        %906 = vmatpush1.msra.mxu0 0.0
        %907 = vmatprep.subr.mxu0 0.0
        %908 = vmatpush1.msra.mxu0 0.0
        %909 = vmatprep.subr.mxu0 0.0
        %910 = vmatpush1.msra.mxu0 0.0
        %911 = vmatprep.subr.mxu0 0.0
        %912 = vmatpush1.msra.mxu0 0.0
        %913 = vmatprep.subr.mxu0 0.0
        %914 = vmatpush1.msra.mxu0 0.0
        %915 = vmatprep.subr.mxu0 0.0
        %916 = vmatpush1.msra.mxu0 0.0
        %917 = vmatprep.subr.mxu0 0.0
        %918 = vmatpush1.msra.mxu0 0.0
        %919 = vmatprep.subr.mxu0 0.0
        %920 = vmatpush1.msra.mxu0 0.0
        %921 = vmatprep.subr.mxu0 0.0
        %922 = vmatpush1.msra.mxu0 0.0
        %923 = vmatprep.subr.mxu0 0.0
        %924 = vmatpush1.msra.mxu0 0.0
        %925 = vmatprep.subr.mxu0 0.0
        %926 = vmatpush1.msra.mxu0 0.0
        %927 = vmatprep.subr.mxu0 0.0
        %928 = vmatpush1.msra.mxu0 0.0
        %929 = vmatprep.subr.mxu0 0.0
        %930 = vmatpush1.msra.mxu0 0.0
        %931 = vmatprep.subr.mxu0 0.0
        %932 = vmatpush1.msra.mxu0 0.0
        %933 = vmatprep.subr.mxu0 0.0
        %934 = vmatpush1.msra.mxu0 0.0
        %935 = vmatprep.subr.mxu0 0.0
        %936 = vmatpush1.msra.mxu0 0.0
        %937 = vmatprep.subr.mxu0 0.0
        %938 = vmatpush1.msra.mxu0 0.0
        %939 = vmatprep.subr.mxu0 0.0
        %940 = vmatpush1.msra.mxu0 0.0
        %941 = vmatprep.subr.mxu0 0.0
        %942 = vmatpush1.msra.mxu0 0.0
        %943 = vmatprep.subr.mxu0 0.0
        %944 = vmatpush1.msra.mxu0 0.0
        %945 = vmatprep.subr.mxu0 0.0
        %946 = vmatpush1.msra.mxu0 0.0
        %947 = vmatprep.mubr.f32.mxu0 0.0
        %948 = vmatmul.mubr.f32.gmra.mrb[0].mxu0 %v881
        %v949 = vpop.f32.mrb[0].mxu0
        %v950 = vadd.f32 0.0, %v949
        %v951 = vpop.f32.mrb[0].mxu0
        %952 = vdwg.mxu0
        %v954 = vlaneseq
        %v955 = vshrl.u32 %v954, 7
        %v956 = vsub.s32 0, %v955
        %v957 = vrot.slane %v705, %v956
        %v959 = vadd.f32 %v957, %v950
        %960 = vrot.lane.b32.xlu0 %v698, 112
        %v961 = vpop.permute.xlu0 %960
        %962 = vrot.lane.b32.xlu0 %v698, 80
        %v963 = vpop.permute.xlu0 %962
        %v964 = vsel %vm709, %v961, 0
        %v966 = vsel %vm709, %v963, 0
        %968 = vmatprep.subr.mxu0 0.0
        %969 = vmatpush1.xpose.msra.mxu0 %v966
        %970 = vmatprep.subr.mxu0 0.0
        %971 = vmatpush1.xpose.msra.mxu0 0.0
        %972 = vmatprep.subr.mxu0 0.0
        %973 = vmatpush1.xpose.msra.mxu0 0.0
        %974 = vmatprep.subr.mxu0 0.0
        %975 = vmatpush1.xpose.msra.mxu0 0.0
        %976 = vmatprep.subr.mxu0 0.0
        %977 = vmatpush1.xpose.msra.mxu0 0.0
        %978 = vmatprep.subr.mxu0 0.0
        %979 = vmatpush1.xpose.msra.mxu0 0.0
        %980 = vmatprep.subr.mxu0 0.0
        %981 = vmatpush1.xpose.msra.mxu0 0.0
        %982 = vmatprep.subr.mxu0 0.0
        %983 = vmatpush1.xpose.msra.mxu0 0.0
        %984 = vmatprep.subr.mxu0 0.0
        %985 = vmatpush1.xpose.msra.mxu0 0.0
        %986 = vmatprep.subr.mxu0 0.0
        %987 = vmatpush1.xpose.msra.mxu0 0.0
        %988 = vmatprep.subr.mxu0 0.0
        %989 = vmatpush1.xpose.msra.mxu0 0.0
        %990 = vmatprep.subr.mxu0 0.0
        %991 = vmatpush1.xpose.msra.mxu0 0.0
        %992 = vmatprep.subr.mxu0 0.0
        %993 = vmatpush1.xpose.msra.mxu0 0.0
        %994 = vmatprep.subr.mxu0 0.0
        %995 = vmatpush1.xpose.msra.mxu0 0.0
        %996 = vmatprep.subr.mxu0 0.0
        %997 = vmatpush1.xpose.msra.mxu0 0.0
        %998 = vmatprep.subr.mxu0 0.0
        %999 = vmatpush1.xpose.msra.mxu0 0.0
        %1000 = vmatprep.subr.mxu0 0.0
        %1001 = vmatpush1.xpose.msra.mxu0 0.0
        %1002 = vmatprep.subr.mxu0 0.0
        %1003 = vmatpush1.xpose.msra.mxu0 0.0
        %1004 = vmatprep.subr.mxu0 0.0
        %1005 = vmatpush1.xpose.msra.mxu0 0.0
        %1006 = vmatprep.subr.mxu0 0.0
        %1007 = vmatpush1.xpose.msra.mxu0 0.0
        %1008 = vmatprep.subr.mxu0 0.0
        %1009 = vmatpush1.xpose.msra.mxu0 0.0
        %1010 = vmatprep.subr.mxu0 0.0
        %1011 = vmatpush1.xpose.msra.mxu0 0.0
        %1012 = vmatprep.subr.mxu0 0.0
        %1013 = vmatpush1.xpose.msra.mxu0 0.0
        %1014 = vmatprep.subr.mxu0 0.0
        %1015 = vmatpush1.xpose.msra.mxu0 0.0
        %1016 = vmatprep.subr.mxu0 0.0
        %1017 = vmatpush1.xpose.msra.mxu0 0.0
        %1018 = vmatprep.subr.mxu0 0.0
        %1019 = vmatpush1.xpose.msra.mxu0 0.0
        %1020 = vmatprep.subr.mxu0 0.0
        %1021 = vmatpush1.xpose.msra.mxu0 0.0
        %1022 = vmatprep.subr.mxu0 0.0
        %1023 = vmatpush1.xpose.msra.mxu0 0.0
        %1024 = vmatprep.subr.mxu0 0.0
        %1025 = vmatpush1.xpose.msra.mxu0 0.0
        %1026 = vmatprep.subr.mxu0 0.0
        %1027 = vmatpush1.xpose.msra.mxu0 0.0
        %1028 = vmatprep.subr.mxu0 0.0
        %1029 = vmatpush1.xpose.msra.mxu0 0.0
        %1030 = vmatprep.subr.mxu0 0.0
        %1031 = vmatpush1.xpose.msra.mxu0 0.0
        %1032 = vmatprep.mubr.f32.mxu0 0.0
        %1033 = vmatmul.mubr.f32.gmra.mrb[0].mxu0 %v964
        %v1034 = vpop.f32.mrb[0].mxu0
        %v1035 = vadd.f32 0.0, %v1034
        %v1036 = vpop.f32.mrb[0].mxu0
        %1037 = vdwg.mxu0
        %v1038 = vmul.f32 %v1035, 0.25
        %v1039 = vadd.f32 %v1038, %v789
        %v1040 = vsel %vm792, %v1039, -inf
        %1041 = vmax.xlane.f32.xlu0 %v1040
        %v1042 = vpop.xlane.xlu0 %1041
        %v1043 = vsub.f32 %v1039, %v1042
        %v1044 = vmul.f32 %v1043, 1.442695
        %v1045 = vpow.pop %v1044
        %v1046 = vsel %vm792, %v1045, 0.0
        %1047 = vadd.xlane.f32.xlu0 %v1046
        %v1048 = vpop.xlane.xlu0 %1047
        %v1049 = vrcp.pop %v1048
        %v1050 = vmul.f32 %v1045, %v1049
        %1051 = vrot.lane.b32.xlu0 %v698, 48
        %v1052 = vpop.permute.xlu0 %1051
        %v1055 = vsel %vm792, %v1050, 0
        %1057 = vmatprep.subr.mxu0 0.0
        %1058 = vmatpush1.msra.mxu0 %v1052
        %1059 = vmatprep.subr.mxu0 0.0
        %1060 = vmatpush1.msra.mxu0 0.0
        %1061 = vmatprep.subr.mxu0 0.0
        %1062 = vmatpush1.msra.mxu0 0.0
        %1063 = vmatprep.subr.mxu0 0.0
        %1064 = vmatpush1.msra.mxu0 0.0
        %1065 = vmatprep.subr.mxu0 0.0
        %1066 = vmatpush1.msra.mxu0 0.0
        %1067 = vmatprep.subr.mxu0 0.0
        %1068 = vmatpush1.msra.mxu0 0.0
        %1069 = vmatprep.subr.mxu0 0.0
        %1070 = vmatpush1.msra.mxu0 0.0
        %1071 = vmatprep.subr.mxu0 0.0
        %1072 = vmatpush1.msra.mxu0 0.0
        %1073 = vmatprep.subr.mxu0 0.0
        %1074 = vmatpush1.msra.mxu0 0.0
        %1075 = vmatprep.subr.mxu0 0.0
        %1076 = vmatpush1.msra.mxu0 0.0
        %1077 = vmatprep.subr.mxu0 0.0
        %1078 = vmatpush1.msra.mxu0 0.0
        %1079 = vmatprep.subr.mxu0 0.0
        %1080 = vmatpush1.msra.mxu0 0.0
        %1081 = vmatprep.subr.mxu0 0.0
        %1082 = vmatpush1.msra.mxu0 0.0
        %1083 = vmatprep.subr.mxu0 0.0
        %1084 = vmatpush1.msra.mxu0 0.0
        %1085 = vmatprep.subr.mxu0 0.0
        %1086 = vmatpush1.msra.mxu0 0.0
        %1087 = vmatprep.subr.mxu0 0.0
        %1088 = vmatpush1.msra.mxu0 0.0
        %1089 = vmatprep.subr.mxu0 0.0
        %1090 = vmatpush1.msra.mxu0 0.0
        %1091 = vmatprep.subr.mxu0 0.0
        %1092 = vmatpush1.msra.mxu0 0.0
        %1093 = vmatprep.subr.mxu0 0.0
        %1094 = vmatpush1.msra.mxu0 0.0
        %1095 = vmatprep.subr.mxu0 0.0
        %1096 = vmatpush1.msra.mxu0 0.0
        %1097 = vmatprep.subr.mxu0 0.0
        %1098 = vmatpush1.msra.mxu0 0.0
        %1099 = vmatprep.subr.mxu0 0.0
        %1100 = vmatpush1.msra.mxu0 0.0
        %1101 = vmatprep.subr.mxu0 0.0
        %1102 = vmatpush1.msra.mxu0 0.0
        %1103 = vmatprep.subr.mxu0 0.0
        %1104 = vmatpush1.msra.mxu0 0.0
        %1105 = vmatprep.subr.mxu0 0.0
        %1106 = vmatpush1.msra.mxu0 0.0
        %1107 = vmatprep.subr.mxu0 0.0
        %1108 = vmatpush1.msra.mxu0 0.0
        %1109 = vmatprep.subr.mxu0 0.0
        %1110 = vmatpush1.msra.mxu0 0.0
        %1111 = vmatprep.subr.mxu0 0.0
        %1112 = vmatpush1.msra.mxu0 0.0
        %1113 = vmatprep.subr.mxu0 0.0
        %1114 = vmatpush1.msra.mxu0 0.0
        %1115 = vmatprep.subr.mxu0 0.0
        %1116 = vmatpush1.msra.mxu0 0.0
        %1117 = vmatprep.subr.mxu0 0.0
        %1118 = vmatpush1.msra.mxu0 0.0
        %1119 = vmatprep.subr.mxu0 0.0
        %1120 = vmatpush1.msra.mxu0 0.0
        %1121 = vmatprep.mubr.f32.mxu0 0.0
        %1122 = vmatmul.mubr.f32.gmra.mrb[0].mxu0 %v1055
        %v1123 = vpop.f32.mrb[0].mxu0
        %v1124 = vadd.f32 0.0, %v1123
        %v1125 = vpop.f32.mrb[0].mxu0
        %1126 = vdwg.mxu0
        %v1128 = vsel %vm709, %v1124, 0
        %1130 = vmatprep.subr.mxu0 0.0
        %1131 = vmatpush1.msra.mxu0 %v703
        %1132 = vmatprep.subr.mxu0 0.0
        %1133 = vmatpush1.msra.mxu0 %v704
        %1134 = vmatprep.subr.mxu0 0.0
        %1135 = vmatpush1.msra.mxu0 0.0
        %1136 = vmatprep.subr.mxu0 0.0
        %1137 = vmatpush1.msra.mxu0 0.0
        %1138 = vmatprep.subr.mxu0 0.0
        %1139 = vmatpush1.msra.mxu0 0.0
        %1140 = vmatprep.subr.mxu0 0.0
        %1141 = vmatpush1.msra.mxu0 0.0
        %1142 = vmatprep.subr.mxu0 0.0
        %1143 = vmatpush1.msra.mxu0 0.0
        %1144 = vmatprep.subr.mxu0 0.0
        %1145 = vmatpush1.msra.mxu0 0.0
        %1146 = vmatprep.subr.mxu0 0.0
        %1147 = vmatpush1.msra.mxu0 0.0
        %1148 = vmatprep.subr.mxu0 0.0
        %1149 = vmatpush1.msra.mxu0 0.0
        %1150 = vmatprep.subr.mxu0 0.0
        %1151 = vmatpush1.msra.mxu0 0.0
        %1152 = vmatprep.subr.mxu0 0.0
        %1153 = vmatpush1.msra.mxu0 0.0
        %1154 = vmatprep.subr.mxu0 0.0
        %1155 = vmatpush1.msra.mxu0 0.0
        %1156 = vmatprep.subr.mxu0 0.0
        %1157 = vmatpush1.msra.mxu0 0.0
        %1158 = vmatprep.subr.mxu0 0.0
        %1159 = vmatpush1.msra.mxu0 0.0
        %1160 = vmatprep.subr.mxu0 0.0
        %1161 = vmatpush1.msra.mxu0 0.0
        %1162 = vmatprep.subr.mxu0 0.0
        %1163 = vmatpush1.msra.mxu0 0.0
        %1164 = vmatprep.subr.mxu0 0.0
        %1165 = vmatpush1.msra.mxu0 0.0
        %1166 = vmatprep.subr.mxu0 0.0
        %1167 = vmatpush1.msra.mxu0 0.0
        %1168 = vmatprep.subr.mxu0 0.0
        %1169 = vmatpush1.msra.mxu0 0.0
        %1170 = vmatprep.subr.mxu0 0.0
        %1171 = vmatpush1.msra.mxu0 0.0
        %1172 = vmatprep.subr.mxu0 0.0
        %1173 = vmatpush1.msra.mxu0 0.0
        %1174 = vmatprep.subr.mxu0 0.0
        %1175 = vmatpush1.msra.mxu0 0.0
        %1176 = vmatprep.subr.mxu0 0.0
        %1177 = vmatpush1.msra.mxu0 0.0
        %1178 = vmatprep.subr.mxu0 0.0
        %1179 = vmatpush1.msra.mxu0 0.0
        %1180 = vmatprep.subr.mxu0 0.0
        %1181 = vmatpush1.msra.mxu0 0.0
        %1182 = vmatprep.subr.mxu0 0.0
        %1183 = vmatpush1.msra.mxu0 0.0
        %1184 = vmatprep.subr.mxu0 0.0
        %1185 = vmatpush1.msra.mxu0 0.0
        %1186 = vmatprep.subr.mxu0 0.0
        %1187 = vmatpush1.msra.mxu0 0.0
        %1188 = vmatprep.subr.mxu0 0.0
        %1189 = vmatpush1.msra.mxu0 0.0
        %1190 = vmatprep.subr.mxu0 0.0
        %1191 = vmatpush1.msra.mxu0 0.0
        %1192 = vmatprep.subr.mxu0 0.0
        %1193 = vmatpush1.msra.mxu0 0.0
        %1194 = vmatprep.mubr.f32.mxu0 0.0
        %1195 = vmatmul.mubr.f32.gmra.mrb[0].mxu0 %v1128
        %v1196 = vpop.f32.mrb[0].mxu0
        %v1197 = vadd.f32 0.0, %v1196
        %v1198 = vpop.f32.mrb[0].mxu0
        %1199 = vdwg.mxu0
        %v1200 = vadd.f32 %v959, %v1197
        %v1201 = vadd.f32 %v1200, %v616
        %v1202 = vld [vmem:[%s8] sm:$0x1]
        %v1203 = vld [vmem:[%s9] sm:$0x1]
        %v1204 = vsel %vm588, %v1201, 0.0
        %1205 = vadd.xlane.f32.xlu0 %v1204
        %v1206 = vpop.xlane.xlu0 %1205
        %v1207 = vmul.f32 %v1206, %v592
        %v1208 = vsub.f32 %v1201, %v1207
        %v1209 = vmul.f32 %v1208, %v1208
        %v1210 = vsel %vm588, %v1209, 0.0
        %1211 = vadd.xlane.f32.xlu0 %v1210
        %v1212 = vpop.xlane.xlu0 %1211
        %v1213 = vmul.f32 %v1212, %v592
        %v1214 = vadd.f32 %v1213, 1e-12
        %v1215 = vrsqrt.pop %v1214
        %v1216 = vmul.f32 %v1208, %v1215
        %v1218 = vlaneseq
        %v1219 = vshrl.u32 %v1218, 7
        %v1220 = vsub.s32 0, %v1219
        %v1221 = vrot.slane %v1202, %v1220
        %v1223 = vmul.f32 %v1216, %v1221
        %v1225 = vlaneseq
        %v1226 = vshrl.u32 %v1225, 7
        %v1227 = vsub.s32 0, %v1226
        %v1228 = vrot.slane %v1203, %v1227
        %v1230 = vadd.f32 %v1223, %v1228
        %v1231 = vld [vmem:[%s10] sm:$0xff]
        %v1232 = vld [vmem:[%s10 + $0x8] sm:$0xff]
        %v1233 = vld [vmem:[%s10 + $0x10] sm:$0xff]
        %v1234 = vld [vmem:[%s10 + $0x18] sm:$0xff]
        %v1235 = vld [vmem:[%s11] sm:$0x1]
        %v1237 = vlaneseq
        %v1238 = vshrl.u32 %v1237, 7
        %v1239 = vsub.s32 0, %v1238
        %v1240 = vrot.slane %v1235, %v1239
        %v1243 = vsel %vm588, %v1230, 0
        %1245 = vmatprep.subr.mxu0 0.0
        %1246 = vmatpush1.msra.mxu0 %v1231
        %1247 = vmatprep.subr.mxu0 0.0
        %1248 = vmatpush1.msra.mxu0 %v1232
        %1249 = vmatprep.subr.mxu0 0.0
        %1250 = vmatpush1.msra.mxu0 %v1233
        %1251 = vmatprep.subr.mxu0 0.0
        %1252 = vmatpush1.msra.mxu0 %v1234
        %1253 = vmatprep.subr.mxu0 0.0
        %1254 = vmatpush1.msra.mxu0 0.0
        %1255 = vmatprep.subr.mxu0 0.0
        %1256 = vmatpush1.msra.mxu0 0.0
        %1257 = vmatprep.subr.mxu0 0.0
        %1258 = vmatpush1.msra.mxu0 0.0
        %1259 = vmatprep.subr.mxu0 0.0
        %1260 = vmatpush1.msra.mxu0 0.0
        %1261 = vmatprep.subr.mxu0 0.0
        %1262 = vmatpush1.msra.mxu0 0.0
        %1263 = vmatprep.subr.mxu0 0.0
        %1264 = vmatpush1.msra.mxu0 0.0
        %1265 = vmatprep.subr.mxu0 0.0
        %1266 = vmatpush1.msra.mxu0 0.0
        %1267 = vmatprep.subr.mxu0 0.0
        %1268 = vmatpush1.msra.mxu0 0.0
        %1269 = vmatprep.subr.mxu0 0.0
        %1270 = vmatpush1.msra.mxu0 0.0
        %1271 = vmatprep.subr.mxu0 0.0
        %1272 = vmatpush1.msra.mxu0 0.0
        %1273 = vmatprep.subr.mxu0 0.0
        %1274 = vmatpush1.msra.mxu0 0.0
        %1275 = vmatprep.subr.mxu0 0.0
        %1276 = vmatpush1.msra.mxu0 0.0
        %1277 = vmatprep.subr.mxu0 0.0
        %1278 = vmatpush1.msra.mxu0 0.0
        %1279 = vmatprep.subr.mxu0 0.0
        %1280 = vmatpush1.msra.mxu0 0.0
        %1281 = vmatprep.subr.mxu0 0.0
        %1282 = vmatpush1.msra.mxu0 0.0
        %1283 = vmatprep.subr.mxu0 0.0
        %1284 = vmatpush1.msra.mxu0 0.0
        %1285 = vmatprep.subr.mxu0 0.0
        %1286 = vmatpush1.msra.mxu0 0.0
        %1287 = vmatprep.subr.mxu0 0.0
        %1288 = vmatpush1.msra.mxu0 0.0
        %1289 = vmatprep.subr.mxu0 0.0
        %1290 = vmatpush1.msra.mxu0 0.0
        %1291 = vmatprep.subr.mxu0 0.0
        %1292 = vmatpush1.msra.mxu0 0.0
        %1293 = vmatprep.subr.mxu0 0.0
        %1294 = vmatpush1.msra.mxu0 0.0
        %1295 = vmatprep.subr.mxu0 0.0
        %1296 = vmatpush1.msra.mxu0 0.0
        %1297 = vmatprep.subr.mxu0 0.0
        %1298 = vmatpush1.msra.mxu0 0.0
        %1299 = vmatprep.subr.mxu0 0.0
        %1300 = vmatpush1.msra.mxu0 0.0
        %1301 = vmatprep.subr.mxu0 0.0
        %1302 = vmatpush1.msra.mxu0 0.0
        %1303 = vmatprep.subr.mxu0 0.0
        %1304 = vmatpush1.msra.mxu0 0.0
        %1305 = vmatprep.subr.mxu0 0.0
        %1306 = vmatpush1.msra.mxu0 0.0
        %1307 = vmatprep.subr.mxu0 0.0
        %1308 = vmatpush1.msra.mxu0 0.0
        %1309 = vmatprep.mubr.f32.mxu0 0.0
        %1310 = vmatmul.mubr.f32.gmra.mrb[0].mxu0 %v1243
        %v1311 = vpop.f32.mrb[0].mxu0
        %v1312 = vadd.f32 %v1240, %v1311
        %v1313 = vpop.f32.mrb[0].mxu0
        %1314 = vdwg.mxu0
        %v1315 = vmul.f32 %v1312, 0.5
        %v1316 = vmul.f32 %v1312, 0.044715
        %v1317 = vmul.f32 %v1316, %v1312
        %v1318 = vmul.f32 %v1317, %v1312
        %v1319 = vadd.f32 %v1312, %v1318
        %v1320 = vmul.f32 %v1319, 0.7978846
        %v1321 = vtanh.pop %v1320
        %v1322 = vadd.f32 %v1321, 1.0
        %v1323 = vmul.f32 %v1315, %v1322
        %v1324 = vld [vmem:[%s12] sm:$0xff]
        %v1325 = vld [vmem:[%s12 + $0x8] sm:$0xff]
        %v1326 = vld [vmem:[%s12 + $0x10] sm:$0xff]
        %v1327 = vld [vmem:[%s12 + $0x18] sm:$0xff]
        %v1328 = vld [vmem:[%s12 + $0x20] sm:$0xff]
        %v1329 = vld [vmem:[%s12 + $0x28] sm:$0xff]
        %v1330 = vld [vmem:[%s12 + $0x30] sm:$0xff]
        %v1331 = vld [vmem:[%s12 + $0x38] sm:$0xff]
        %v1332 = vld [vmem:[%s13] sm:$0x1]
        %v1334 = vlaneseq
        %v1335 = vshrl.u32 %v1334, 7
        %v1336 = vsub.s32 0, %v1335
        %v1337 = vrot.slane %v1332, %v1336
        %vm1339 = vcmask 523264
        %v1341 = vsel %vm1339, %v1323, 0
        %1343 = vmatprep.subr.mxu0 0.0
        %1344 = vmatpush1.msra.mxu0 %v1324
        %1345 = vmatprep.subr.mxu0 0.0
        %1346 = vmatpush1.msra.mxu0 %v1325
        %1347 = vmatprep.subr.mxu0 0.0
        %1348 = vmatpush1.msra.mxu0 %v1326
        %1349 = vmatprep.subr.mxu0 0.0
        %1350 = vmatpush1.msra.mxu0 %v1327
        %1351 = vmatprep.subr.mxu0 0.0
        %1352 = vmatpush1.msra.mxu0 %v1328
        %1353 = vmatprep.subr.mxu0 0.0
        %1354 = vmatpush1.msra.mxu0 %v1329
        %1355 = vmatprep.subr.mxu0 0.0
        %1356 = vmatpush1.msra.mxu0 %v1330
        %1357 = vmatprep.subr.mxu0 0.0
        %1358 = vmatpush1.msra.mxu0 %v1331
        %1359 = vmatprep.subr.mxu0 0.0
        %1360 = vmatpush1.msra.mxu0 0.0
        %1361 = vmatprep.subr.mxu0 0.0
        %1362 = vmatpush1.msra.mxu0 0.0
        %1363 = vmatprep.subr.mxu0 0.0
        %1364 = vmatpush1.msra.mxu0 0.0
        %1365 = vmatprep.subr.mxu0 0.0
        %1366 = vmatpush1.msra.mxu0 0.0
        %1367 = vmatprep.subr.mxu0 0.0
        %1368 = vmatpush1.msra.mxu0 0.0
        %1369 = vmatprep.subr.mxu0 0.0
        %1370 = vmatpush1.msra.mxu0 0.0
        %1371 = vmatprep.subr.mxu0 0.0
        %1372 = vmatpush1.msra.mxu0 0.0
        %1373 = vmatprep.subr.mxu0 0.0
        %1374 = vmatpush1.msra.mxu0 0.0
        %1375 = vmatprep.subr.mxu0 0.0
        %1376 = vmatpush1.msra.mxu0 0.0
        %1377 = vmatprep.subr.mxu0 0.0
        %1378 = vmatpush1.msra.mxu0 0.0
        %1379 = vmatprep.subr.mxu0 0.0
        %1380 = vmatpush1.msra.mxu0 0.0
        %1381 = vmatprep.subr.mxu0 0.0
        %1382 = vmatpush1.msra.mxu0 0.0
        %1383 = vmatprep.subr.mxu0 0.0
        %1384 = vmatpush1.msra.mxu0 0.0
        %1385 = vmatprep.subr.mxu0 0.0
        %1386 = vmatpush1.msra.mxu0 0.0
        %1387 = vmatprep.subr.mxu0 0.0
        %1388 = vmatpush1.msra.mxu0 0.0
        %1389 = vmatprep.subr.mxu0 0.0
        %1390 = vmatpush1.msra.mxu0 0.0
        %1391 = vmatprep.subr.mxu0 0.0
        %1392 = vmatpush1.msra.mxu0 0.0
        %1393 = vmatprep.subr.mxu0 0.0
        %1394 = vmatpush1.msra.mxu0 0.0
        %1395 = vmatprep.subr.mxu0 0.0
        %1396 = vmatpush1.msra.mxu0 0.0
        %1397 = vmatprep.subr.mxu0 0.0
        %1398 = vmatpush1.msra.mxu0 0.0
        %1399 = vmatprep.subr.mxu0 0.0
        %1400 = vmatpush1.msra.mxu0 0.0
        %1401 = vmatprep.subr.mxu0 0.0
        %1402 = vmatpush1.msra.mxu0 0.0
        %1403 = vmatprep.subr.mxu0 0.0
        %1404 = vmatpush1.msra.mxu0 0.0
        %1405 = vmatprep.subr.mxu0 0.0
        %1406 = vmatpush1.msra.mxu0 0.0
        %1407 = vmatprep.mubr.f32.mxu0 0.0
        %1408 = vmatmul.mubr.f32.gmra.mrb[0].mxu0 %v1341
        %v1409 = vpop.f32.mrb[0].mxu0
        %v1410 = vadd.f32 %v1337, %v1409
        %v1411 = vpop.f32.mrb[0].mxu0
        %1412 = vdwg.mxu0
        %v1413 = vadd.f32 %v1410, %v1230
        %v1414 = vld [vmem:[%s14] sm:$0x1]
        %v1415 = vld [vmem:[%s15] sm:$0x1]
        %v1416 = vsel %vm588, %v1413, 0.0
        %1417 = vadd.xlane.f32.xlu0 %v1416
        %v1418 = vpop.xlane.xlu0 %1417
        %v1419 = vmul.f32 %v1418, %v592
        %v1420 = vsub.f32 %v1413, %v1419
        %v1421 = vmul.f32 %v1420, %v1420
        %v1422 = vsel %vm588, %v1421, 0.0
        %1423 = vadd.xlane.f32.xlu0 %v1422
        %v1424 = vpop.xlane.xlu0 %1423
        %v1425 = vmul.f32 %v1424, %v592
        %v1426 = vadd.f32 %v1425, 1e-12
        %v1427 = vrsqrt.pop %v1426
        %v1428 = vmul.f32 %v1420, %v1427
        %v1430 = vlaneseq
        %v1431 = vshrl.u32 %v1430, 7
        %v1432 = vsub.s32 0, %v1431
        %v1433 = vrot.slane %v1414, %v1432
        %v1435 = vmul.f32 %v1428, %v1433
        %v1437 = vlaneseq
        %v1438 = vshrl.u32 %v1437, 7
        %v1439 = vsub.s32 0, %v1438
        %v1440 = vrot.slane %v1415, %v1439
        %v1442 = vadd.f32 %v1435, %v1440
        %s1443 = scalar_lea.vmem %s4, 32
        %v1444 = vld [vmem:[%s1443] sm:$0xff]
        %v1445 = vld [vmem:[%s1443 + $0x8] sm:$0xff]
        %v1446 = vld [vmem:[%s1443 + $0x10] sm:$0xff]
        %v1447 = vld [vmem:[%s1443 + $0x18] sm:$0xff]
        %s1448 = scalar_lea.vmem %s5, 1
        %v1449 = vld [vmem:[%s1448] sm:$0x1]
        %v1451 = vlaneseq
        %v1452 = vshrl.u32 %v1451, 7
        %v1453 = vsub.s32 0, %v1452
        %v1454 = vrot.slane %v1449, %v1453
        %v1457 = vsel %vm588, %v1442, 0
        %1459 = vmatprep.subr.mxu0 0.0
        %1460 = vmatpush1.msra.mxu0 %v1444
        %1461 = vmatprep.subr.mxu0 0.0
        %1462 = vmatpush1.msra.mxu0 %v1445
        %1463 = vmatprep.subr.mxu0 0.0
        %1464 = vmatpush1.msra.mxu0 %v1446
        %1465 = vmatprep.subr.mxu0 0.0
        %1466 = vmatpush1.msra.mxu0 %v1447
        %1467 = vmatprep.subr.mxu0 0.0
        %1468 = vmatpush1.msra.mxu0 0.0
        %1469 = vmatprep.subr.mxu0 0.0
        %1470 = vmatpush1.msra.mxu0 0.0
        %1471 = vmatprep.subr.mxu0 0.0
        %1472 = vmatpush1.msra.mxu0 0.0
        %1473 = vmatprep.subr.mxu0 0.0
        %1474 = vmatpush1.msra.mxu0 0.0
        %1475 = vmatprep.subr.mxu0 0.0
        %1476 = vmatpush1.msra.mxu0 0.0
        %1477 = vmatprep.subr.mxu0 0.0
        %1478 = vmatpush1.msra.mxu0 0.0
        %1479 = vmatprep.subr.mxu0 0.0
        %1480 = vmatpush1.msra.mxu0 0.0
        %1481 = vmatprep.subr.mxu0 0.0
        %1482 = vmatpush1.msra.mxu0 0.0
        %1483 = vmatprep.subr.mxu0 0.0
        %1484 = vmatpush1.msra.mxu0 0.0
        %1485 = vmatprep.subr.mxu0 0.0
        %1486 = vmatpush1.msra.mxu0 0.0
        %1487 = vmatprep.subr.mxu0 0.0
        %1488 = vmatpush1.msra.mxu0 0.0
        %1489 = vmatprep.subr.mxu0 0.0
        %1490 = vmatpush1.msra.mxu0 0.0
        %1491 = vmatprep.subr.mxu0 0.0
        %1492 = vmatpush1.msra.mxu0 0.0
        %1493 = vmatprep.subr.mxu0 0.0
        %1494 = vmatpush1.msra.mxu0 0.0
        %1495 = vmatprep.subr.mxu0 0.0
        %1496 = vmatpush1.msra.mxu0 0.0
        %1497 = vmatprep.subr.mxu0 0.0
        %1498 = vmatpush1.msra.mxu0 0.0
        %1499 = vmatprep.subr.mxu0 0.0
        %1500 = vmatpush1.msra.mxu0 0.0
        %1501 = vmatprep.subr.mxu0 0.0
        %1502 = vmatpush1.msra.mxu0 0.0
        %1503 = vmatprep.subr.mxu0 0.0
        %1504 = vmatpush1.msra.mxu0 0.0
        %1505 = vmatprep.subr.mxu0 0.0
        %1506 = vmatpush1.msra.mxu0 0.0
        %1507 = vmatprep.subr.mxu0 0.0
        %1508 = vmatpush1.msra.mxu0 0.0
        %1509 = vmatprep.subr.mxu0 0.0
        %1510 = vmatpush1.msra.mxu0 0.0
        %1511 = vmatprep.subr.mxu0 0.0
        %1512 = vmatpush1.msra.mxu0 0.0
        %1513 = vmatprep.subr.mxu0 0.0
        %1514 = vmatpush1.msra.mxu0 0.0
        %1515 = vmatprep.subr.mxu0 0.0
        %1516 = vmatpush1.msra.mxu0 0.0
        %1517 = vmatprep.subr.mxu0 0.0
        %1518 = vmatpush1.msra.mxu0 0.0
        %1519 = vmatprep.subr.mxu0 0.0
        %1520 = vmatpush1.msra.mxu0 0.0
        %1521 = vmatprep.subr.mxu0 0.0
        %1522 = vmatpush1.msra.mxu0 0.0
        %1523 = vmatprep.mubr.f32.mxu0 0.0
        %1524 = vmatmul.mubr.f32.gmra.mrb[0].mxu0 %v1457
        %v1525 = vpop.f32.mrb[0].mxu0
        %v1526 = vadd.f32 %v1454, %v1525
        %v1527 = vpop.f32.mrb[0].mxu0
        %1528 = vdwg.mxu0
        %s1529 = scalar_lea.vmem %s6, 32
        %v1530 = vld [vmem:[%s1529] sm:$0xff]
        %v1531 = vld [vmem:[%s1529 + $0x8] sm:$0xff]
        %v1532 = vld [vmem:[%s1529 + $0x10] sm:$0xff]
        %v1533 = vld [vmem:[%s1529 + $0x18] sm:$0xff]
        %s1534 = scalar_lea.vmem %s7, 1
        %v1535 = vld [vmem:[%s1534] sm:$0x1]
        %1537 = vrot.lane.b32.xlu0 %v1526, 96
        %v1538 = vpop.permute.xlu0 %1537
        %v1539 = vsel %vm709, %v1526, 0
        %v1541 = vsel %vm709, %v1538, 0
        %1543 = vmatprep.subr.mxu0 0.0
        %1544 = vmatpush1.xpose.msra.mxu0 %v1541
        %1545 = vmatprep.subr.mxu0 0.0
        %1546 = vmatpush1.xpose.msra.mxu0 0.0
        %1547 = vmatprep.subr.mxu0 0.0
        %1548 = vmatpush1.xpose.msra.mxu0 0.0
        %1549 = vmatprep.subr.mxu0 0.0
        %1550 = vmatpush1.xpose.msra.mxu0 0.0
        %1551 = vmatprep.subr.mxu0 0.0
        %1552 = vmatpush1.xpose.msra.mxu0 0.0
        %1553 = vmatprep.subr.mxu0 0.0
        %1554 = vmatpush1.xpose.msra.mxu0 0.0
        %1555 = vmatprep.subr.mxu0 0.0
        %1556 = vmatpush1.xpose.msra.mxu0 0.0
        %1557 = vmatprep.subr.mxu0 0.0
        %1558 = vmatpush1.xpose.msra.mxu0 0.0
        %1559 = vmatprep.subr.mxu0 0.0
        %1560 = vmatpush1.xpose.msra.mxu0 0.0
        %1561 = vmatprep.subr.mxu0 0.0
        %1562 = vmatpush1.xpose.msra.mxu0 0.0
        %1563 = vmatprep.subr.mxu0 0.0
        %1564 = vmatpush1.xpose.msra.mxu0 0.0
        %1565 = vmatprep.subr.mxu0 0.0
        %1566 = vmatpush1.xpose.msra.mxu0 0.0
        %1567 = vmatprep.subr.mxu0 0.0
        %1568 = vmatpush1.xpose.msra.mxu0 0.0
        %1569 = vmatprep.subr.mxu0 0.0
        %1570 = vmatpush1.xpose.msra.mxu0 0.0
        %1571 = vmatprep.subr.mxu0 0.0
        %1572 = vmatpush1.xpose.msra.mxu0 0.0
        %1573 = vmatprep.subr.mxu0 0.0
        %1574 = vmatpush1.xpose.msra.mxu0 0.0
        %1575 = vmatprep.subr.mxu0 0.0
        %1576 = vmatpush1.xpose.msra.mxu0 0.0
        %1577 = vmatprep.subr.mxu0 0.0
        %1578 = vmatpush1.xpose.msra.mxu0 0.0
        %1579 = vmatprep.subr.mxu0 0.0
        %1580 = vmatpush1.xpose.msra.mxu0 0.0
        %1581 = vmatprep.subr.mxu0 0.0
        %1582 = vmatpush1.xpose.msra.mxu0 0.0
        %1583 = vmatprep.subr.mxu0 0.0
        %1584 = vmatpush1.xpose.msra.mxu0 0.0
        %1585 = vmatprep.subr.mxu0 0.0
        %1586 = vmatpush1.xpose.msra.mxu0 0.0
        %1587 = vmatprep.subr.mxu0 0.0
        %1588 = vmatpush1.xpose.msra.mxu0 0.0
        %1589 = vmatprep.subr.mxu0 0.0
        %1590 = vmatpush1.xpose.msra.mxu0 0.0
        %1591 = vmatprep.subr.mxu0 0.0
        %1592 = vmatpush1.xpose.msra.mxu0 0.0
        %1593 = vmatprep.subr.mxu0 0.0
        %1594 = vmatpush1.xpose.msra.mxu0 0.0
        %1595 = vmatprep.subr.mxu0 0.0
        %1596 = vmatpush1.xpose.msra.mxu0 0.0
        %1597 = vmatprep.subr.mxu0 0.0
        %1598 = vmatpush1.xpose.msra.mxu0 0.0
        %1599 = vmatprep.subr.mxu0 0.0
        %1600 = vmatpush1.xpose.msra.mxu0 0.0
        %1601 = vmatprep.subr.mxu0 0.0
        %1602 = vmatpush1.xpose.msra.mxu0 0.0
        %1603 = vmatprep.subr.mxu0 0.0
        %1604 = vmatpush1.xpose.msra.mxu0 0.0
        %1605 = vmatprep.subr.mxu0 0.0
        %1606 = vmatpush1.xpose.msra.mxu0 0.0
        %1607 = vmatprep.mubr.f32.mxu0 0.0
        %1608 = vmatmul.mubr.f32.gmra.mrb[0].mxu0 %v1539
        %v1609 = vpop.f32.mrb[0].mxu0
        %v1610 = vadd.f32 0.0, %v1609
        %v1611 = vpop.f32.mrb[0].mxu0
        %1612 = vdwg.mxu0
        %v1613 = vmul.f32 %v1610, 0.25
        %v1614 = vadd.f32 %v1613, %v789
        %v1615 = vsel %vm792, %v1614, -inf
        %1616 = vmax.xlane.f32.xlu0 %v1615
        %v1617 = vpop.xlane.xlu0 %1616
        %v1618 = vsub.f32 %v1614, %v1617
        %v1619 = vmul.f32 %v1618, 1.442695
        %v1620 = vpow.pop %v1619
        %v1621 = vsel %vm792, %v1620, 0.0
        %1622 = vadd.xlane.f32.xlu0 %v1621
        %v1623 = vpop.xlane.xlu0 %1622
        %v1624 = vrcp.pop %v1623
        %v1625 = vmul.f32 %v1620, %v1624
        %1626 = vrot.lane.b32.xlu0 %v1526, 64
        %v1627 = vpop.permute.xlu0 %1626
        %v1630 = vsel %vm792, %v1625, 0
        %1632 = vmatprep.subr.mxu0 0.0
        %1633 = vmatpush1.msra.mxu0 %v1627
        %1634 = vmatprep.subr.mxu0 0.0
        %1635 = vmatpush1.msra.mxu0 0.0
        %1636 = vmatprep.subr.mxu0 0.0
        %1637 = vmatpush1.msra.mxu0 0.0
        %1638 = vmatprep.subr.mxu0 0.0
        %1639 = vmatpush1.msra.mxu0 0.0
        %1640 = vmatprep.subr.mxu0 0.0
        %1641 = vmatpush1.msra.mxu0 0.0
        %1642 = vmatprep.subr.mxu0 0.0
        %1643 = vmatpush1.msra.mxu0 0.0
        %1644 = vmatprep.subr.mxu0 0.0
        %1645 = vmatpush1.msra.mxu0 0.0
        %1646 = vmatprep.subr.mxu0 0.0
        %1647 = vmatpush1.msra.mxu0 0.0
        %1648 = vmatprep.subr.mxu0 0.0
        %1649 = vmatpush1.msra.mxu0 0.0
        %1650 = vmatprep.subr.mxu0 0.0
        %1651 = vmatpush1.msra.mxu0 0.0
        %1652 = vmatprep.subr.mxu0 0.0
        %1653 = vmatpush1.msra.mxu0 0.0
        %1654 = vmatprep.subr.mxu0 0.0
        %1655 = vmatpush1.msra.mxu0 0.0
        %1656 = vmatprep.subr.mxu0 0.0
        %1657 = vmatpush1.msra.mxu0 0.0
        %1658 = vmatprep.subr.mxu0 0.0
        %1659 = vmatpush1.msra.mxu0 0.0
        %1660 = vmatprep.subr.mxu0 0.0
        %1661 = vmatpush1.msra.mxu0 0.0
        %1662 = vmatprep.subr.mxu0 0.0
        %1663 = vmatpush1.msra.mxu0 0.0
        %1664 = vmatprep.subr.mxu0 0.0
        %1665 = vmatpush1.msra.mxu0 0.0
        %1666 = vmatprep.subr.mxu0 0.0
        %1667 = vmatpush1.msra.mxu0 0.0
        %1668 = vmatprep.subr.mxu0 0.0
        %1669 = vmatpush1.msra.mxu0 0.0
        %1670 = vmatprep.subr.mxu0 0.0
        %1671 = vmatpush1.msra.mxu0 0.0
        %1672 = vmatprep.subr.mxu0 0.0
        %1673 = vmatpush1.msra.mxu0 0.0
        %1674 = vmatprep.subr.mxu0 0.0
        %1675 = vmatpush1.msra.mxu0 0.0
        %1676 = vmatprep.subr.mxu0 0.0
        %1677 = vmatpush1.msra.mxu0 0.0
        %1678 = vmatprep.subr.mxu0 0.0
        %1679 = vmatpush1.msra.mxu0 0.0
        %1680 = vmatprep.subr.mxu0 0.0
        %1681 = vmatpush1.msra.mxu0 0.0
        %1682 = vmatprep.subr.mxu0 0.0
        %1683 = vmatpush1.msra.mxu0 0.0
        %1684 = vmatprep.subr.mxu0 0.0
        %1685 = vmatpush1.msra.mxu0 0.0
        %1686 = vmatprep.subr.mxu0 0.0
        %1687 = vmatpush1.msra.mxu0 0.0
        %1688 = vmatprep.subr.mxu0 0.0
        %1689 = vmatpush1.msra.mxu0 0.0
        %1690 = vmatprep.subr.mxu0 0.0
        %1691 = vmatpush1.msra.mxu0 0.0
        %1692 = vmatprep.subr.mxu0 0.0
        %1693 = vmatpush1.msra.mxu0 0.0
        %1694 = vmatprep.subr.mxu0 0.0
        %1695 = vmatpush1.msra.mxu0 0.0
        %1696 = vmatprep.mubr.f32.mxu0 0.0
        %1697 = vmatmul.mubr.f32.gmra.mrb[0].mxu0 %v1630
        %v1698 = vpop.f32.mrb[0].mxu0
        %v1699 = vadd.f32 0.0, %v1698
        %v1700 = vpop.f32.mrb[0].mxu0
        %1701 = vdwg.mxu0
        %v1703 = vsel %vm709, %v1699, 0
        %1705 = vmatprep.subr.mxu0 0.0
        %1706 = vmatpush1.msra.mxu0 %v1530
        %1707 = vmatprep.subr.mxu0 0.0
        %1708 = vmatpush1.msra.mxu0 %v1531
        %1709 = vmatprep.subr.mxu0 0.0
        %1710 = vmatpush1.msra.mxu0 0.0
        %1711 = vmatprep.subr.mxu0 0.0
        %1712 = vmatpush1.msra.mxu0 0.0
        %1713 = vmatprep.subr.mxu0 0.0
        %1714 = vmatpush1.msra.mxu0 0.0
        %1715 = vmatprep.subr.mxu0 0.0
        %1716 = vmatpush1.msra.mxu0 0.0
        %1717 = vmatprep.subr.mxu0 0.0
        %1718 = vmatpush1.msra.mxu0 0.0
        %1719 = vmatprep.subr.mxu0 0.0
        %1720 = vmatpush1.msra.mxu0 0.0
        %1721 = vmatprep.subr.mxu0 0.0
        %1722 = vmatpush1.msra.mxu0 0.0
        %1723 = vmatprep.subr.mxu0 0.0
        %1724 = vmatpush1.msra.mxu0 0.0
        %1725 = vmatprep.subr.mxu0 0.0
        %1726 = vmatpush1.msra.mxu0 0.0
        %1727 = vmatprep.subr.mxu0 0.0
        %1728 = vmatpush1.msra.mxu0 0.0
        %1729 = vmatprep.subr.mxu0 0.0
        %1730 = vmatpush1.msra.mxu0 0.0
        %1731 = vmatprep.subr.mxu0 0.0
        %1732 = vmatpush1.msra.mxu0 0.0
        %1733 = vmatprep.subr.mxu0 0.0
        %1734 = vmatpush1.msra.mxu0 0.0
        %1735 = vmatprep.subr.mxu0 0.0
        %1736 = vmatpush1.msra.mxu0 0.0
        %1737 = vmatprep.subr.mxu0 0.0
        %1738 = vmatpush1.msra.mxu0 0.0
        %1739 = vmatprep.subr.mxu0 0.0
        %1740 = vmatpush1.msra.mxu0 0.0
        %1741 = vmatprep.subr.mxu0 0.0
        %1742 = vmatpush1.msra.mxu0 0.0
        %1743 = vmatprep.subr.mxu0 0.0
        %1744 = vmatpush1.msra.mxu0 0.0
        %1745 = vmatprep.subr.mxu0 0.0
        %1746 = vmatpush1.msra.mxu0 0.0
        %1747 = vmatprep.subr.mxu0 0.0
        %1748 = vmatpush1.msra.mxu0 0.0
        %1749 = vmatprep.subr.mxu0 0.0
        %1750 = vmatpush1.msra.mxu0 0.0
        %1751 = vmatprep.subr.mxu0 0.0
        %1752 = vmatpush1.msra.mxu0 0.0
        %1753 = vmatprep.subr.mxu0 0.0
        %1754 = vmatpush1.msra.mxu0 0.0
        %1755 = vmatprep.subr.mxu0 0.0
        %1756 = vmatpush1.msra.mxu0 0.0
        %1757 = vmatprep.subr.mxu0 0.0
        %1758 = vmatpush1.msra.mxu0 0.0
        %1759 = vmatprep.subr.mxu0 0.0
        %1760 = vmatpush1.msra.mxu0 0.0
        %1761 = vmatprep.subr.mxu0 0.0
        %1762 = vmatpush1.msra.mxu0 0.0
        %1763 = vmatprep.subr.mxu0 0.0
        %1764 = vmatpush1.msra.mxu0 0.0
        %1765 = vmatprep.subr.mxu0 0.0
        %1766 = vmatpush1.msra.mxu0 0.0
        %1767 = vmatprep.subr.mxu0 0.0
        %1768 = vmatpush1.msra.mxu0 0.0
        %1769 = vmatprep.mubr.f32.mxu0 0.0
        %1770 = vmatmul.mubr.f32.gmra.mrb[0].mxu0 %v1703
        %v1771 = vpop.f32.mrb[0].mxu0
        %v1772 = vadd.f32 0.0, %v1771
        %v1773 = vpop.f32.mrb[0].mxu0
        %1774 = vdwg.mxu0
        %v1776 = vlaneseq
        %v1777 = vshrl.u32 %v1776, 7
        %v1778 = vsub.s32 0, %v1777
        %v1779 = vrot.slane %v1535, %v1778
        %v1781 = vadd.f32 %v1779, %v1772
        %1782 = vrot.lane.b32.xlu0 %v1526, 112
        %v1783 = vpop.permute.xlu0 %1782
        %1784 = vrot.lane.b32.xlu0 %v1526, 80
        %v1785 = vpop.permute.xlu0 %1784
        %v1786 = vsel %vm709, %v1783, 0
        %v1788 = vsel %vm709, %v1785, 0
        %1790 = vmatprep.subr.mxu0 0.0
        %1791 = vmatpush1.xpose.msra.mxu0 %v1788
        %1792 = vmatprep.subr.mxu0 0.0
        %1793 = vmatpush1.xpose.msra.mxu0 0.0
        %1794 = vmatprep.subr.mxu0 0.0
        %1795 = vmatpush1.xpose.msra.mxu0 0.0
        %1796 = vmatprep.subr.mxu0 0.0
        %1797 = vmatpush1.xpose.msra.mxu0 0.0
        %1798 = vmatprep.subr.mxu0 0.0
        %1799 = vmatpush1.xpose.msra.mxu0 0.0
        %1800 = vmatprep.subr.mxu0 0.0
        %1801 = vmatpush1.xpose.msra.mxu0 0.0
        %1802 = vmatprep.subr.mxu0 0.0
        %1803 = vmatpush1.xpose.msra.mxu0 0.0
        %1804 = vmatprep.subr.mxu0 0.0
        %1805 = vmatpush1.xpose.msra.mxu0 0.0
        %1806 = vmatprep.subr.mxu0 0.0
        %1807 = vmatpush1.xpose.msra.mxu0 0.0
        %1808 = vmatprep.subr.mxu0 0.0
        %1809 = vmatpush1.xpose.msra.mxu0 0.0
        %1810 = vmatprep.subr.mxu0 0.0
        %1811 = vmatpush1.xpose.msra.mxu0 0.0
        %1812 = vmatprep.subr.mxu0 0.0
        %1813 = vmatpush1.xpose.msra.mxu0 0.0
        %1814 = vmatprep.subr.mxu0 0.0
        %1815 = vmatpush1.xpose.msra.mxu0 0.0
        %1816 = vmatprep.subr.mxu0 0.0
        %1817 = vmatpush1.xpose.msra.mxu0 0.0
        %1818 = vmatprep.subr.mxu0 0.0
        %1819 = vmatpush1.xpose.msra.mxu0 0.0
        %1820 = vmatprep.subr.mxu0 0.0
        %1821 = vmatpush1.xpose.msra.mxu0 0.0
        %1822 = vmatprep.subr.mxu0 0.0
        %1823 = vmatpush1.xpose.msra.mxu0 0.0
        %1824 = vmatprep.subr.mxu0 0.0
        %1825 = vmatpush1.xpose.msra.mxu0 0.0
        %1826 = vmatprep.subr.mxu0 0.0
        %1827 = vmatpush1.xpose.msra.mxu0 0.0
        %1828 = vmatprep.subr.mxu0 0.0
        %1829 = vmatpush1.xpose.msra.mxu0 0.0
        %1830 = vmatprep.subr.mxu0 0.0
        %1831 = vmatpush1.xpose.msra.mxu0 0.0
        %1832 = vmatprep.subr.mxu0 0.0
        %1833 = vmatpush1.xpose.msra.mxu0 0.0
        %1834 = vmatprep.subr.mxu0 0.0
        %1835 = vmatpush1.xpose.msra.mxu0 0.0
        %1836 = vmatprep.subr.mxu0 0.0
        %1837 = vmatpush1.xpose.msra.mxu0 0.0
        %1838 = vmatprep.subr.mxu0 0.0
        %1839 = vmatpush1.xpose.msra.mxu0 0.0
        %1840 = vmatprep.subr.mxu0 0.0
        %1841 = vmatpush1.xpose.msra.mxu0 0.0
        %1842 = vmatprep.subr.mxu0 0.0
        %1843 = vmatpush1.xpose.msra.mxu0 0.0
        %1844 = vmatprep.subr.mxu0 0.0
        %1845 = vmatpush1.xpose.msra.mxu0 0.0
        %1846 = vmatprep.subr.mxu0 0.0
        %1847 = vmatpush1.xpose.msra.mxu0 0.0
        %1848 = vmatprep.subr.mxu0 0.0
        %1849 = vmatpush1.xpose.msra.mxu0 0.0
        %1850 = vmatprep.subr.mxu0 0.0
        %1851 = vmatpush1.xpose.msra.mxu0 0.0
        %1852 = vmatprep.subr.mxu0 0.0
        %1853 = vmatpush1.xpose.msra.mxu0 0.0
        %1854 = vmatprep.mubr.f32.mxu0 0.0
        %1855 = vmatmul.mubr.f32.gmra.mrb[0].mxu0 %v1786
        %v1856 = vpop.f32.mrb[0].mxu0
        %v1857 = vadd.f32 0.0, %v1856
        %v1858 = vpop.f32.mrb[0].mxu0
        %1859 = vdwg.mxu0
        %v1860 = vmul.f32 %v1857, 0.25
        %v1861 = vadd.f32 %v1860, %v789
        %v1862 = vsel %vm792, %v1861, -inf
        %1863 = vmax.xlane.f32.xlu0 %v1862
        %v1864 = vpop.xlane.xlu0 %1863
        %v1865 = vsub.f32 %v1861, %v1864
        %v1866 = vmul.f32 %v1865, 1.442695
        %v1867 = vpow.pop %v1866
        %v1868 = vsel %vm792, %v1867, 0.0
        %1869 = vadd.xlane.f32.xlu0 %v1868
        %v1870 = vpop.xlane.xlu0 %1869
        %v1871 = vrcp.pop %v1870
        %v1872 = vmul.f32 %v1867, %v1871
        %1873 = vrot.lane.b32.xlu0 %v1526, 48
        %v1874 = vpop.permute.xlu0 %1873
        %v1877 = vsel %vm792, %v1872, 0
        %1879 = vmatprep.subr.mxu0 0.0
        %1880 = vmatpush1.msra.mxu0 %v1874
        %1881 = vmatprep.subr.mxu0 0.0
        %1882 = vmatpush1.msra.mxu0 0.0
        %1883 = vmatprep.subr.mxu0 0.0
        %1884 = vmatpush1.msra.mxu0 0.0
        %1885 = vmatprep.subr.mxu0 0.0
        %1886 = vmatpush1.msra.mxu0 0.0
        %1887 = vmatprep.subr.mxu0 0.0
        %1888 = vmatpush1.msra.mxu0 0.0
        %1889 = vmatprep.subr.mxu0 0.0
        %1890 = vmatpush1.msra.mxu0 0.0
        %1891 = vmatprep.subr.mxu0 0.0
        %1892 = vmatpush1.msra.mxu0 0.0
        %1893 = vmatprep.subr.mxu0 0.0
        %1894 = vmatpush1.msra.mxu0 0.0
        %1895 = vmatprep.subr.mxu0 0.0
        %1896 = vmatpush1.msra.mxu0 0.0
        %1897 = vmatprep.subr.mxu0 0.0
        %1898 = vmatpush1.msra.mxu0 0.0
        %1899 = vmatprep.subr.mxu0 0.0
        %1900 = vmatpush1.msra.mxu0 0.0
        %1901 = vmatprep.subr.mxu0 0.0
        %1902 = vmatpush1.msra.mxu0 0.0
        %1903 = vmatprep.subr.mxu0 0.0
        %1904 = vmatpush1.msra.mxu0 0.0
        %1905 = vmatprep.subr.mxu0 0.0
        %1906 = vmatpush1.msra.mxu0 0.0
        %1907 = vmatprep.subr.mxu0 0.0
        %1908 = vmatpush1.msra.mxu0 0.0
        %1909 = vmatprep.subr.mxu0 0.0
        %1910 = vmatpush1.msra.mxu0 0.0
        %1911 = vmatprep.subr.mxu0 0.0
        %1912 = vmatpush1.msra.mxu0 0.0
        %1913 = vmatprep.subr.mxu0 0.0
        %1914 = vmatpush1.msra.mxu0 0.0
        %1915 = vmatprep.subr.mxu0 0.0
        %1916 = vmatpush1.msra.mxu0 0.0
        %1917 = vmatprep.subr.mxu0 0.0
        %1918 = vmatpush1.msra.mxu0 0.0
        %1919 = vmatprep.subr.mxu0 0.0
        %1920 = vmatpush1.msra.mxu0 0.0
        %1921 = vmatprep.subr.mxu0 0.0
        %1922 = vmatpush1.msra.mxu0 0.0
        %1923 = vmatprep.subr.mxu0 0.0
        %1924 = vmatpush1.msra.mxu0 0.0
        %1925 = vmatprep.subr.mxu0 0.0
        %1926 = vmatpush1.msra.mxu0 0.0
        %1927 = vmatprep.subr.mxu0 0.0
        %1928 = vmatpush1.msra.mxu0 0.0
        %1929 = vmatprep.subr.mxu0 0.0
        %1930 = vmatpush1.msra.mxu0 0.0
        %1931 = vmatprep.subr.mxu0 0.0
        %1932 = vmatpush1.msra.mxu0 0.0
        %1933 = vmatprep.subr.mxu0 0.0
        %1934 = vmatpush1.msra.mxu0 0.0
        %1935 = vmatprep.subr.mxu0 0.0
        %1936 = vmatpush1.msra.mxu0 0.0
        %1937 = vmatprep.subr.mxu0 0.0
        %1938 = vmatpush1.msra.mxu0 0.0
        %1939 = vmatprep.subr.mxu0 0.0
        %1940 = vmatpush1.msra.mxu0 0.0
        %1941 = vmatprep.subr.mxu0 0.0
        %1942 = vmatpush1.msra.mxu0 0.0
        %1943 = vmatprep.mubr.f32.mxu0 0.0
        %1944 = vmatmul.mubr.f32.gmra.mrb[0].mxu0 %v1877
        %v1945 = vpop.f32.mrb[0].mxu0
        %v1946 = vadd.f32 0.0, %v1945
        %v1947 = vpop.f32.mrb[0].mxu0
        %1948 = vdwg.mxu0
        %v1950 = vsel %vm709, %v1946, 0
        %1952 = vmatprep.subr.mxu0 0.0
        %1953 = vmatpush1.msra.mxu0 %v1532
        %1954 = vmatprep.subr.mxu0 0.0
        %1955 = vmatpush1.msra.mxu0 %v1533
        %1956 = vmatprep.subr.mxu0 0.0
        %1957 = vmatpush1.msra.mxu0 0.0
        %1958 = vmatprep.subr.mxu0 0.0
        %1959 = vmatpush1.msra.mxu0 0.0
        %1960 = vmatprep.subr.mxu0 0.0
        %1961 = vmatpush1.msra.mxu0 0.0
        %1962 = vmatprep.subr.mxu0 0.0
        %1963 = vmatpush1.msra.mxu0 0.0
        %1964 = vmatprep.subr.mxu0 0.0
        %1965 = vmatpush1.msra.mxu0 0.0
        %1966 = vmatprep.subr.mxu0 0.0
        %1967 = vmatpush1.msra.mxu0 0.0
        %1968 = vmatprep.subr.mxu0 0.0
        %1969 = vmatpush1.msra.mxu0 0.0
        %1970 = vmatprep.subr.mxu0 0.0
        %1971 = vmatpush1.msra.mxu0 0.0
        %1972 = vmatprep.subr.mxu0 0.0
        %1973 = vmatpush1.msra.mxu0 0.0
        %1974 = vmatprep.subr.mxu0 0.0
        %1975 = vmatpush1.msra.mxu0 0.0
        %1976 = vmatprep.subr.mxu0 0.0
        %1977 = vmatpush1.msra.mxu0 0.0
        %1978 = vmatprep.subr.mxu0 0.0
        %1979 = vmatpush1.msra.mxu0 0.0
        %1980 = vmatprep.subr.mxu0 0.0
        %1981 = vmatpush1.msra.mxu0 0.0
        %1982 = vmatprep.subr.mxu0 0.0
        %1983 = vmatpush1.msra.mxu0 0.0
        %1984 = vmatprep.subr.mxu0 0.0
        %1985 = vmatpush1.msra.mxu0 0.0
        %1986 = vmatprep.subr.mxu0 0.0
        %1987 = vmatpush1.msra.mxu0 0.0
        %1988 = vmatprep.subr.mxu0 0.0
        %1989 = vmatpush1.msra.mxu0 0.0
        %1990 = vmatprep.subr.mxu0 0.0
        %1991 = vmatpush1.msra.mxu0 0.0
        %1992 = vmatprep.subr.mxu0 0.0
        %1993 = vmatpush1.msra.mxu0 0.0
        %1994 = vmatprep.subr.mxu0 0.0
        %1995 = vmatpush1.msra.mxu0 0.0
        %1996 = vmatprep.subr.mxu0 0.0
        %1997 = vmatpush1.msra.mxu0 0.0
        %1998 = vmatprep.subr.mxu0 0.0
        %1999 = vmatpush1.msra.mxu0 0.0
        %2000 = vmatprep.subr.mxu0 0.0
        %2001 = vmatpush1.msra.mxu0 0.0
        %2002 = vmatprep.subr.mxu0 0.0
        %2003 = vmatpush1.msra.mxu0 0.0
        %2004 = vmatprep.subr.mxu0 0.0
        %2005 = vmatpush1.msra.mxu0 0.0
        %2006 = vmatprep.subr.mxu0 0.0
        %2007 = vmatpush1.msra.mxu0 0.0
        %2008 = vmatprep.subr.mxu0 0.0
        %2009 = vmatpush1.msra.mxu0 0.0
        %2010 = vmatprep.subr.mxu0 0.0
        %2011 = vmatpush1.msra.mxu0 0.0
        %2012 = vmatprep.subr.mxu0 0.0
        %2013 = vmatpush1.msra.mxu0 0.0
        %2014 = vmatprep.subr.mxu0 0.0
        %2015 = vmatpush1.msra.mxu0 0.0
        %2016 = vmatprep.mubr.f32.mxu0 0.0
        %2017 = vmatmul.mubr.f32.gmra.mrb[0].mxu0 %v1950
        %v2018 = vpop.f32.mrb[0].mxu0
        %v2019 = vadd.f32 0.0, %v2018
        %v2020 = vpop.f32.mrb[0].mxu0
        %2021 = vdwg.mxu0
        %v2022 = vadd.f32 %v1781, %v2019
        %v2023 = vadd.f32 %v2022, %v1442
        %s2024 = scalar_lea.vmem %s8, 1
        %v2025 = vld [vmem:[%s2024] sm:$0x1]
        %s2026 = scalar_lea.vmem %s9, 1
        %v2027 = vld [vmem:[%s2026] sm:$0x1]
        %v2028 = vsel %vm588, %v2023, 0.0
        %2029 = vadd.xlane.f32.xlu0 %v2028
        %v2030 = vpop.xlane.xlu0 %2029
        %v2031 = vmul.f32 %v2030, %v592
        %v2032 = vsub.f32 %v2023, %v2031
        %v2033 = vmul.f32 %v2032, %v2032
        %v2034 = vsel %vm588, %v2033, 0.0
        %2035 = vadd.xlane.f32.xlu0 %v2034
        %v2036 = vpop.xlane.xlu0 %2035
        %v2037 = vmul.f32 %v2036, %v592
        %v2038 = vadd.f32 %v2037, 1e-12
        %v2039 = vrsqrt.pop %v2038
        %v2040 = vmul.f32 %v2032, %v2039
        %v2042 = vlaneseq
        %v2043 = vshrl.u32 %v2042, 7
        %v2044 = vsub.s32 0, %v2043
        %v2045 = vrot.slane %v2025, %v2044
        %v2047 = vmul.f32 %v2040, %v2045
        %v2049 = vlaneseq
        %v2050 = vshrl.u32 %v2049, 7
        %v2051 = vsub.s32 0, %v2050
        %v2052 = vrot.slane %v2027, %v2051
        %v2054 = vadd.f32 %v2047, %v2052
        %s2055 = scalar_lea.vmem %s10, 32
        %v2056 = vld [vmem:[%s2055] sm:$0xff]
        %v2057 = vld [vmem:[%s2055 + $0x8] sm:$0xff]
        %v2058 = vld [vmem:[%s2055 + $0x10] sm:$0xff]
        %v2059 = vld [vmem:[%s2055 + $0x18] sm:$0xff]
        %s2060 = scalar_lea.vmem %s11, 1
        %v2061 = vld [vmem:[%s2060] sm:$0x1]
        %v2063 = vlaneseq
        %v2064 = vshrl.u32 %v2063, 7
        %v2065 = vsub.s32 0, %v2064
        %v2066 = vrot.slane %v2061, %v2065
        %v2069 = vsel %vm588, %v2054, 0
        %2071 = vmatprep.subr.mxu0 0.0
        %2072 = vmatpush1.msra.mxu0 %v2056
        %2073 = vmatprep.subr.mxu0 0.0
        %2074 = vmatpush1.msra.mxu0 %v2057
        %2075 = vmatprep.subr.mxu0 0.0
        %2076 = vmatpush1.msra.mxu0 %v2058
        %2077 = vmatprep.subr.mxu0 0.0
        %2078 = vmatpush1.msra.mxu0 %v2059
        %2079 = vmatprep.subr.mxu0 0.0
        %2080 = vmatpush1.msra.mxu0 0.0
        %2081 = vmatprep.subr.mxu0 0.0
        %2082 = vmatpush1.msra.mxu0 0.0
        %2083 = vmatprep.subr.mxu0 0.0
        %2084 = vmatpush1.msra.mxu0 0.0
        %2085 = vmatprep.subr.mxu0 0.0
        %2086 = vmatpush1.msra.mxu0 0.0
        %2087 = vmatprep.subr.mxu0 0.0
        %2088 = vmatpush1.msra.mxu0 0.0
        %2089 = vmatprep.subr.mxu0 0.0
        %2090 = vmatpush1.msra.mxu0 0.0
        %2091 = vmatprep.subr.mxu0 0.0
        %2092 = vmatpush1.msra.mxu0 0.0
        %2093 = vmatprep.subr.mxu0 0.0
        %2094 = vmatpush1.msra.mxu0 0.0
        %2095 = vmatprep.subr.mxu0 0.0
        %2096 = vmatpush1.msra.mxu0 0.0
        %2097 = vmatprep.subr.mxu0 0.0
        %2098 = vmatpush1.msra.mxu0 0.0
        %2099 = vmatprep.subr.mxu0 0.0
        %2100 = vmatpush1.msra.mxu0 0.0
        %2101 = vmatprep.subr.mxu0 0.0
        %2102 = vmatpush1.msra.mxu0 0.0
        %2103 = vmatprep.subr.mxu0 0.0
        %2104 = vmatpush1.msra.mxu0 0.0
        %2105 = vmatprep.subr.mxu0 0.0
        %2106 = vmatpush1.msra.mxu0 0.0
        %2107 = vmatprep.subr.mxu0 0.0
        %2108 = vmatpush1.msra.mxu0 0.0
        %2109 = vmatprep.subr.mxu0 0.0
        %2110 = vmatpush1.msra.mxu0 0.0
        %2111 = vmatprep.subr.mxu0 0.0
        %2112 = vmatpush1.msra.mxu0 0.0
        %2113 = vmatprep.subr.mxu0 0.0
        %2114 = vmatpush1.msra.mxu0 0.0
        %2115 = vmatprep.subr.mxu0 0.0
        %2116 = vmatpush1.msra.mxu0 0.0
        %2117 = vmatprep.subr.mxu0 0.0
        %2118 = vmatpush1.msra.mxu0 0.0
        %2119 = vmatprep.subr.mxu0 0.0
        %2120 = vmatpush1.msra.mxu0 0.0
        %2121 = vmatprep.subr.mxu0 0.0
        %2122 = vmatpush1.msra.mxu0 0.0
        %2123 = vmatprep.subr.mxu0 0.0
        %2124 = vmatpush1.msra.mxu0 0.0
        %2125 = vmatprep.subr.mxu0 0.0
        %2126 = vmatpush1.msra.mxu0 0.0
        %2127 = vmatprep.subr.mxu0 0.0
        %2128 = vmatpush1.msra.mxu0 0.0
        %2129 = vmatprep.subr.mxu0 0.0
        %2130 = vmatpush1.msra.mxu0 0.0
        %2131 = vmatprep.subr.mxu0 0.0
        %2132 = vmatpush1.msra.mxu0 0.0
        %2133 = vmatprep.subr.mxu0 0.0
        %2134 = vmatpush1.msra.mxu0 0.0
        %2135 = vmatprep.mubr.f32.mxu0 0.0
        %2136 = vmatmul.mubr.f32.gmra.mrb[0].mxu0 %v2069
        %v2137 = vpop.f32.mrb[0].mxu0
        %v2138 = vadd.f32 %v2066, %v2137
        %v2139 = vpop.f32.mrb[0].mxu0
        %2140 = vdwg.mxu0
        %v2141 = vmul.f32 %v2138, 0.5
        %v2142 = vmul.f32 %v2138, 0.044715
        %v2143 = vmul.f32 %v2142, %v2138
        %v2144 = vmul.f32 %v2143, %v2138
        %v2145 = vadd.f32 %v2138, %v2144
        %v2146 = vmul.f32 %v2145, 0.7978846
        %v2147 = vtanh.pop %v2146
        %v2148 = vadd.f32 %v2147, 1.0
        %v2149 = vmul.f32 %v2141, %v2148
        %s2150 = scalar_lea.vmem %s12, 64
        %v2151 = vld [vmem:[%s2150] sm:$0xff]
        %v2152 = vld [vmem:[%s2150 + $0x8] sm:$0xff]
        %v2153 = vld [vmem:[%s2150 + $0x10] sm:$0xff]
        %v2154 = vld [vmem:[%s2150 + $0x18] sm:$0xff]
        %v2155 = vld [vmem:[%s2150 + $0x20] sm:$0xff]
        %v2156 = vld [vmem:[%s2150 + $0x28] sm:$0xff]
        %v2157 = vld [vmem:[%s2150 + $0x30] sm:$0xff]
        %v2158 = vld [vmem:[%s2150 + $0x38] sm:$0xff]
        %s2159 = scalar_lea.vmem %s13, 1
        %v2160 = vld [vmem:[%s2159] sm:$0x1]
        %v2162 = vlaneseq
        %v2163 = vshrl.u32 %v2162, 7
        %v2164 = vsub.s32 0, %v2163
        %v2165 = vrot.slane %v2160, %v2164
        %v2168 = vsel %vm1339, %v2149, 0
        %2170 = vmatprep.subr.mxu0 0.0
        %2171 = vmatpush1.msra.mxu0 %v2151
        %2172 = vmatprep.subr.mxu0 0.0
        %2173 = vmatpush1.msra.mxu0 %v2152
        %2174 = vmatprep.subr.mxu0 0.0
        %2175 = vmatpush1.msra.mxu0 %v2153
        %2176 = vmatprep.subr.mxu0 0.0
        %2177 = vmatpush1.msra.mxu0 %v2154
        %2178 = vmatprep.subr.mxu0 0.0
        %2179 = vmatpush1.msra.mxu0 %v2155
        %2180 = vmatprep.subr.mxu0 0.0
        %2181 = vmatpush1.msra.mxu0 %v2156
        %2182 = vmatprep.subr.mxu0 0.0
        %2183 = vmatpush1.msra.mxu0 %v2157
        %2184 = vmatprep.subr.mxu0 0.0
        %2185 = vmatpush1.msra.mxu0 %v2158
        %2186 = vmatprep.subr.mxu0 0.0
        %2187 = vmatpush1.msra.mxu0 0.0
        %2188 = vmatprep.subr.mxu0 0.0
        %2189 = vmatpush1.msra.mxu0 0.0
        %2190 = vmatprep.subr.mxu0 0.0
        %2191 = vmatpush1.msra.mxu0 0.0
        %2192 = vmatprep.subr.mxu0 0.0
        %2193 = vmatpush1.msra.mxu0 0.0
        %2194 = vmatprep.subr.mxu0 0.0
        %2195 = vmatpush1.msra.mxu0 0.0
        %2196 = vmatprep.subr.mxu0 0.0
        %2197 = vmatpush1.msra.mxu0 0.0
        %2198 = vmatprep.subr.mxu0 0.0
        %2199 = vmatpush1.msra.mxu0 0.0
        %2200 = vmatprep.subr.mxu0 0.0
        %2201 = vmatpush1.msra.mxu0 0.0
        %2202 = vmatprep.subr.mxu0 0.0
        %2203 = vmatpush1.msra.mxu0 0.0
        %2204 = vmatprep.subr.mxu0 0.0
        %2205 = vmatpush1.msra.mxu0 0.0
        %2206 = vmatprep.subr.mxu0 0.0
        %2207 = vmatpush1.msra.mxu0 0.0
        %2208 = vmatprep.subr.mxu0 0.0
        %2209 = vmatpush1.msra.mxu0 0.0
        %2210 = vmatprep.subr.mxu0 0.0
        %2211 = vmatpush1.msra.mxu0 0.0
        %2212 = vmatprep.subr.mxu0 0.0
        %2213 = vmatpush1.msra.mxu0 0.0
        %2214 = vmatprep.subr.mxu0 0.0
        %2215 = vmatpush1.msra.mxu0 0.0
        %2216 = vmatprep.subr.mxu0 0.0
        %2217 = vmatpush1.msra.mxu0 0.0
        %2218 = vmatprep.subr.mxu0 0.0
        %2219 = vmatpush1.msra.mxu0 0.0
        %2220 = vmatprep.subr.mxu0 0.0
        %2221 = vmatpush1.msra.mxu0 0.0
        %2222 = vmatprep.subr.mxu0 0.0
        %2223 = vmatpush1.msra.mxu0 0.0
        %2224 = vmatprep.subr.mxu0 0.0
        %2225 = vmatpush1.msra.mxu0 0.0
        %2226 = vmatprep.subr.mxu0 0.0
        %2227 = vmatpush1.msra.mxu0 0.0
        %2228 = vmatprep.subr.mxu0 0.0
        %2229 = vmatpush1.msra.mxu0 0.0
        %2230 = vmatprep.subr.mxu0 0.0
        %2231 = vmatpush1.msra.mxu0 0.0
        %2232 = vmatprep.subr.mxu0 0.0
        %2233 = vmatpush1.msra.mxu0 0.0
        %2234 = vmatprep.mubr.f32.mxu0 0.0
        %2235 = vmatmul.mubr.f32.gmra.mrb[0].mxu0 %v2168
        %v2236 = vpop.f32.mrb[0].mxu0
        %v2237 = vadd.f32 %v2165, %v2236
        %v2238 = vpop.f32.mrb[0].mxu0
        %2239 = vdwg.mxu0
        %v2240 = vadd.f32 %v2237, %v2054
        %s2241 = scalar_lea.vmem %s14, 1
        %v2242 = vld [vmem:[%s2241] sm:$0x1]
        %s2243 = scalar_lea.vmem %s15, 1
        %v2244 = vld [vmem:[%s2243] sm:$0x1]
        %v2245 = vsel %vm588, %v2240, 0.0
        %2246 = vadd.xlane.f32.xlu0 %v2245
        %v2247 = vpop.xlane.xlu0 %2246
        %v2248 = vmul.f32 %v2247, %v592
        %v2249 = vsub.f32 %v2240, %v2248
        %v2250 = vmul.f32 %v2249, %v2249
        %v2251 = vsel %vm588, %v2250, 0.0
        %2252 = vadd.xlane.f32.xlu0 %v2251
        %v2253 = vpop.xlane.xlu0 %2252
        %v2254 = vmul.f32 %v2253, %v592
        %v2255 = vadd.f32 %v2254, 1e-12
        %v2256 = vrsqrt.pop %v2255
        %v2257 = vmul.f32 %v2249, %v2256
        %v2259 = vlaneseq
        %v2260 = vshrl.u32 %v2259, 7
        %v2261 = vsub.s32 0, %v2260
        %v2262 = vrot.slane %v2242, %v2261
        %v2264 = vmul.f32 %v2257, %v2262
        %v2266 = vlaneseq
        %v2267 = vshrl.u32 %v2266, 7
        %v2268 = vsub.s32 0, %v2267
        %v2269 = vrot.slane %v2244, %v2268
        %v2271 = vadd.f32 %v2264, %v2269
        %vm2272 = vcmask 253952
        %2273 = vst.msk [vmem:[%s576] sm:$0x1] %vm2272, %v2271
        %s2274 = sand.u32 %s428, 1
        %s2275 = scalar_lea.sflag [#allocation3], %s2274
        %s2276 = sand.u32 %s428, 1
        %s2277 = scalar_lea.vmem [#allocation2], %s2276
        // Predicated region
        $region93: #{simcse_forward.1} parent=91 // pred_check
          %p2278 = pneg %p438
        $region94: #{simcse_forward.1} parent=91 // pred_check_branch
          %2280 = sbr.rel (%p2278) target = $region96
        $region95: #{simcse_forward.1} parent=91 // pred_region
          %s2282 = ssub.s32 16, 16
          %2283 = vsyncadd %s2275, %s2282
          %s2284 = smul.addr %s32, 16
          %s2285 = scalar_lea.hbm %s18, %s2284
          %s2287 = sshll.u32 %s2277, 4
          %s2288 = int_to_ptr.vmem [resolvable:$true] %s2287
          %2290 = dma.vmem_to_hbm [thread:$0]  %s2288, 16, %s2285, %s2275
        $region96: #{simcse_forward.1} parent=91 // pred_fallthru
          _
      $region92: #{simcse_forward.1} parent=5 // pred_fallthru
        _
      %p2291 = scmp.le.s32.totalorder 2, %s27
      // Predicated region
      $region97: #{simcse_forward.1} parent=5 // pred_check
        %p2292 = pneg %p2291
      $region98: #{simcse_forward.1} parent=5 // pred_check_branch
        %2294 = sbr.rel (%p2292) target = $region100
      $region99: #{simcse_forward.1} parent=5 // pred_region
        %s2295 = ssub.s32 %s27, 2
        // Predicated region
        $region101: #{simcse_forward.1} parent=99 // pred_check
          %p2296 = pneg %p444
        $region102: #{simcse_forward.1} parent=99 // pred_check_branch
          %2298 = sbr.rel (%p2296) target = $region104
        $region103: #{simcse_forward.1} parent=99 // pred_region
          %s2299 = sand.u32 %s429, 1
          %s2300 = scalar_lea.sflag [#allocation3], %s2299
          %s2301 = sand.u32 %s429, 1
          %s2302 = scalar_lea.vmem [#allocation2], %s2301
          %2303 = dma.done %s2300, 16
        $region104: #{simcse_forward.1} parent=99 // pred_fallthru
          _
      $region100: #{simcse_forward.1} parent=5 // pred_fallthru
        _
    $region6: #{simcse_forward.1} parent=1 // loop_footer
      %s31 = sadd.s32 1, %s27
    $region7: #{simcse_forward.1} parent=1 // loop_footer_branch
      %26 = sbr.rel target = $region3
    $region8: #{simcse_forward.1} parent=1 // loop_exit
      _
    %2304 = vsyncpa [#allocation3], 1
    %s2305 = scalar_lea.sflag [#allocation3], 1
    %2306 = vsyncpa %s2305, 1

</llo_original>
